<compile_context>
chip_gen: v5e
topology: v5e:2x2
jax: 0.10.0
libtpu: 0.0.40
codegen_flags: <defaults>
</compile_context>

<pallas_src>
import math
import functools

import jax
import jax.numpy as jnp
from jax import lax
from jax.experimental import pallas as pl
from jax.experimental.pallas import tpu as pltpu

_EPS = 1e-12  # torch.nn.functional.normalize default eps


def _rescal_kernel(rels_ref, h_ref, t_ref, rel_hbm, *rest,
                   block_b, has_alpha, mxu_dtype):
    # rest = (a_ref, o_ref, rbuf, copy_sem) or (o_ref, rbuf, copy_sem)
    if has_alpha:
        a_ref, o_ref, rbuf, copy_sem = rest
    else:
        o_ref, rbuf, copy_sem = rest
        a_ref = None

    i = pl.program_id(0)
    b0 = i * block_b  # element offset of this tile inside the batch

    # --- kick off the DMA gather of the Bt relation matrices from the HBM table ---
    # (overlaps with the head/tail normalization below)
    for j in range(block_b):
        idx = rels_ref[b0 + j]  # scalar-prefetched relation id (SMEM)
        pltpu.make_async_copy(rel_hbm.at[idx], rbuf.at[j], copy_sem.at[j]).start()

    # --- row-wise L2 normalization of heads / tails (f32 math, EUP reciprocal) ---
    h = h_ref[...].astype(jnp.float32)  # (Bt, Nh, D)
    t = t_ref[...].astype(jnp.float32)  # (Bt, Nt, D)

    h_norm = jnp.sqrt(jnp.sum(h * h, axis=-1, keepdims=True))       # (Bt, Nh, 1)
    t_norm = jnp.sqrt(jnp.sum(t * t, axis=-1, keepdims=True))       # (Bt, Nt, 1)
    h_inv = pl.reciprocal(jnp.maximum(h_norm, _EPS), approx=True)
    t_inv = pl.reciprocal(jnp.maximum(t_norm, _EPS), approx=True)

    # --- wait for the gathered relation matrices ---
    for j in range(block_b):
        pltpu.make_async_copy(rel_hbm.at[0], rbuf.at[j], copy_sem.at[j]).wait()

    r = rbuf[...].astype(jnp.float32)                                # (Bt, D, D)

    # Frobenius-norm hoist: the score is linear in R, so instead of dividing the
    # whole (D, D) matrix, multiply the final per-batch scalar by 1/max(||R||_F, eps).
    rsq = jnp.sum(jnp.sum(r * r, axis=-1), axis=-1, keepdims=True)   # (Bt, 1)
    frob = jnp.sqrt(rsq)
    frob_inv = pl.reciprocal(jnp.maximum(frob, _EPS), approx=True)   # (Bt, 1)

    rb = r.astype(mxu_dtype)                                         # bf16 MXU operand

    if a_ref is not None:
        hn = (h * h_inv).astype(mxu_dtype)                           # (Bt, Nh, D)
        tn = (t * t_inv).astype(mxu_dtype)                           # (Bt, Nt, D)
        # H @ R  (batched, f32 accumulation on the MXU)
        hr = jnp.einsum('bnd,bde->bne', hn, rb,
                        preferred_element_type=jnp.float32)          # (Bt, Nh, D)
        # (H @ R) @ T^T via contraction over the last dims — no explicit transpose
        s = jnp.einsum('bne,bme->bnm', hr.astype(mxu_dtype), tn,
                       preferred_element_type=jnp.float32)           # (Bt, Nh, Nt)
        w = a_ref[...].astype(jnp.float32) * s
        tot = jnp.sum(jnp.sum(w, axis=-1), axis=-1, keepdims=True)   # (Bt, 1)
    else:
        # alpha == 1 everywhere  =>  sum_{i,j} h_i R t_j^T = (sum_i h_i) R (sum_j t_j)^T
        hs = jnp.sum(h * h_inv, axis=1, keepdims=True).astype(mxu_dtype)  # (Bt, 1, D)
        ts = jnp.sum(t * t_inv, axis=1, keepdims=True).astype(mxu_dtype)  # (Bt, 1, D)
        v = jnp.einsum('bnd,bde->bne', hs, rb,
                       preferred_element_type=jnp.float32)                # (Bt, 1, D)
        s = jnp.einsum('bne,bme->bnm', v.astype(mxu_dtype), ts,
                       preferred_element_type=jnp.float32)                # (Bt, 1, 1)
        tot = jnp.sum(s, axis=-1)                                         # (Bt, 1)

    # one clean write per grid step — no read-modify-write of a resident block
    o_ref[...] = (tot * frob_inv).astype(o_ref.dtype)


def _pick_block_b(B, per_batch_bytes, vmem_budget):
    """Largest batch tile that fits the VMEM budget, preferring sublane-friendly sizes."""
    cap = max(1, int(vmem_budget // max(int(per_batch_bytes), 1)))
    best = None
    for bt in range(min(B, cap), 0, -1):
        if B % bt:
            continue
        if bt % 8 == 0 or bt == B:
            return bt            # (8,128)-rule friendly output tile
        if best is None:
            best = bt
    # TODO(synk): pad the batch instead of falling back to an unaligned tile.
    return best if best is not None else 1


def rescal_pallas(heads, tails, rel_table, rels, alpha_scores=None, *,
                  block_b=None, mxu_dtype=jnp.bfloat16,
                  vmem_limit_bytes=48 * 1024 * 1024):
    """heads (B,Nh,D), tails (B,Nt,D), rel_table (n_rels,D,D), rels (B,) int32,
    alpha (B,Nh,Nt) optional -> scores (B,) float32."""
    B, Nh, D = heads.shape
    Nt = tails.shape[1]
    n_rels = rel_table.shape[0]
    assert rel_table.shape == (n_rels, D, D)
    has_alpha = alpha_scores is not None

    if block_b is None:
        itemsize = jnp.dtype(heads.dtype).itemsize
        rel_itemsize = jnp.dtype(rel_table.dtype).itemsize
        per_b = 2 * (Nh * D + Nt * D) * itemsize               # double-buffered h/t tiles
        if has_alpha:
            per_b += 2 * Nh * Nt * jnp.dtype(alpha_scores.dtype).itemsize
        per_b += D * D * rel_itemsize                           # gathered relation matrix
        per_b += 4 * (Nh * D + Nt * D + D * D + Nh * Nt)        # f32 temporaries headroom
        block_b = _pick_block_b(B, per_b, vmem_limit_bytes // 2)
    assert B % block_b == 0, (B, block_b)
    grid = (B // block_b,)

    in_specs = [
        pl.BlockSpec((block_b, Nh, D), lambda i, rels_ref: (i, 0, 0)),
        pl.BlockSpec((block_b, Nt, D), lambda i, rels_ref: (i, 0, 0)),
        pl.BlockSpec(memory_space=pl.ANY),   # relation table stays in HBM; DMA-gathered
    ]
    args = [heads, tails, rel_table]         # no wrapper-side dtype casts
    if has_alpha:
        in_specs.append(pl.BlockSpec((block_b, Nh, Nt), lambda i, rels_ref: (i, 0, 0)))
        args.append(alpha_scores)

    kernel = functools.partial(_rescal_kernel, block_b=block_b,
                               has_alpha=has_alpha, mxu_dtype=mxu_dtype)

    out = pl.pallas_call(
        kernel,
        out_shape=jax.ShapeDtypeStruct((B, 1), jnp.float32),
        grid_spec=pltpu.PrefetchScalarGridSpec(
            num_scalar_prefetch=1,           # rels -> SMEM, readable in-kernel
            grid=grid,
            in_specs=in_specs,
            out_specs=pl.BlockSpec((block_b, 1), lambda i, rels_ref: (i, 0)),
            scratch_shapes=[
                pltpu.VMEM((block_b, D, D), rel_table.dtype),   # gathered R matrices
                pltpu.SemaphoreType.DMA((block_b,)),
            ],
        ),
        compiler_params=pltpu.CompilerParams(
            dimension_semantics=("parallel",),   # independent batch tiles
            vmem_limit_bytes=vmem_limit_bytes,
        ),
    )(rels.astype(jnp.int32), *args)
    return out[:, 0]


if __name__ == "__main__":
    key = jax.random.PRNGKey(0)
    B, Nh, Nt, D, n_rels = 16, 8, 8, 32, 4
    k1, k2, k3, k4, k5 = jax.random.split(key, 5)

    heads = jax.random.normal(k1, (B, Nh, D), jnp.float32)
    tails = jax.random.normal(k2, (B, Nt, D), jnp.float32)
    rels = jax.random.randint(k3, (B,), 0, n_rels, dtype=jnp.int32)
    alpha = jax.random.normal(k4, (B, Nh, Nt), jnp.float32)

    # deterministic xavier_uniform init of nn.Embedding(n_rels, D*D).weight
    bound = math.sqrt(6.0 / (n_rels + D * D))
    rel_emb_weight = jax.random.uniform(k5, (n_rels, D * D), jnp.float32,
                                        minval=-bound, maxval=bound)
    rel_table = rel_emb_weight.reshape(n_rels, D, D)  # no per-example gather in the glue

    scores = jax.block_until_ready(
        rescal_pallas(heads, tails, rel_table, rels, alpha, block_b=8))
    scores_noalpha = jax.block_until_ready(
        rescal_pallas(heads, tails, rel_table, rels, None))   # auto block_b

    # pure-JAX f32 reference
    def _norm(x):
        return x / jnp.maximum(jnp.sqrt(jnp.sum(x * x, axis=-1, keepdims=True)), _EPS)

    rn_ref = _norm(rel_emb_weight)[rels].reshape(B, D, D)   # flattened-L2 == Frobenius
    hn_ref = _norm(heads)
    tn_ref = _norm(tails)
    s_full = jnp.einsum('bnd,bde,bme->bnm', hn_ref, rn_ref, tn_ref)
    ref_alpha = jnp.sum(alpha * s_full, axis=(-2, -1))
    ref_noalpha = jnp.sum(s_full, axis=(-2, -1))

    # tolerance accounts for bf16 MXU operands + EUP approx reciprocals (f32 accumulation)
    assert jnp.allclose(scores, ref_alpha, atol=2e-2, rtol=2e-2), (scores, ref_alpha)
    assert jnp.allclose(scores_noalpha, ref_noalpha, atol=2e-2, rtol=2e-2), \
        (scores_noalpha, ref_noalpha)

    print("KERNEL_OK")
</pallas_src>

<mosaic_0001>
module attributes {stable_mosaic.version = 11 : i64} {
  func.func @_rescal_kernel(%arg0: i32, %arg1: memref<16xi32, #tpu.memory_space<smem>>, %arg2: memref<8x8x32xf32, #tpu.memory_space<vmem>>, %arg3: memref<8x8x32xf32, #tpu.memory_space<vmem>>, %arg4: memref<4x32x32xf32, #tpu.memory_space<any>>, %arg5: memref<8x8x8xf32, #tpu.memory_space<vmem>>, %arg6: memref<8x1xf32, #tpu.memory_space<vmem>>, %arg7: memref<8x32x32xf32, #tpu.memory_space<vmem>>, %arg8: memref<8x!tpu.dma_semaphore, #tpu.memory_space<semaphore_mem>>) attributes {dimension_semantics = [#tpu.dimension_semantics<parallel>], iteration_bounds = array<i64: 2>, scalar_prefetch = 1 : i64, scratch_operands = 2 : i64, tpu.core_type = #tpu.core_type<tc>, window_params = [{transform_indices = @transform_0, window_bounds = array<i64: 8, 8, 32>}, {transform_indices = @transform_1, window_bounds = array<i64: 8, 8, 32>}, {}, {transform_indices = @transform_3, window_bounds = array<i64: 8, 8, 8>}, {transform_indices = @transform_4, window_bounds = array<i64: 8, 1>}]} {
    %c8_i32 = arith.constant 8 : i32
    %0 = arith.muli %arg0, %c8_i32 : i32
    %c0_i32 = arith.constant 0 : i32
    %1 = arith.addi %0, %c0_i32 : i32
    %2 = arith.index_cast %1 : i32 to index
    %3 = memref.load %arg1[%2] : memref<16xi32, #tpu.memory_space<smem>>
    %c0_i32_0 = arith.constant 0 : i32
    %c0_i32_1 = arith.constant 0 : i32
    %c0_i32_2 = arith.constant 0 : i32
    %c0_i32_3 = arith.constant 0 : i32
    %4 = tpu.memref_slice %arg4[%3, %c0_i32_2, %c0_i32_3] : memref<4x32x32xf32, #tpu.memory_space<any>> -> memref<1x32x32xf32, #tpu.memory_space<any>>
    %5 = tpu.memref_squeeze %4 : memref<1x32x32xf32, #tpu.memory_space<any>> -> memref<32x32xf32, #tpu.memory_space<any>>
    %c0_i32_4 = arith.constant 0 : i32
    %c0_i32_5 = arith.constant 0 : i32
    %6 = tpu.memref_slice %arg7[%c0_i32_0, %c0_i32_4, %c0_i32_5] : memref<8x32x32xf32, #tpu.memory_space<vmem>> -> memref<1x32x32xf32, #tpu.memory_space<vmem>>
    %7 = tpu.memref_squeeze %6 : memref<1x32x32xf32, #tpu.memory_space<vmem>> -> memref<32x32xf32, #tpu.memory_space<vmem>>
    %8 = tpu.memref_slice %arg8[%c0_i32_1] : memref<8x!tpu.dma_semaphore, #tpu.memory_space<semaphore_mem>> -> memref<1x!tpu.dma_semaphore, #tpu.memory_space<semaphore_mem>>
    %9 = tpu.memref_squeeze %8 : memref<1x!tpu.dma_semaphore, #tpu.memory_space<semaphore_mem>> -> memref<!tpu.dma_semaphore, #tpu.memory_space<semaphore_mem>>
    tpu.enqueue_dma source(%5 : memref<32x32xf32, #tpu.memory_space<any>>) target(%7 : memref<32x32xf32, #tpu.memory_space<vmem>>) target_semaphore(%9 : memref<!tpu.dma_semaphore, #tpu.memory_space<semaphore_mem>>)
    %c1_i32 = arith.constant 1 : i32
    %10 = arith.addi %0, %c1_i32 : i32
    %11 = arith.index_cast %10 : i32 to index
    %12 = memref.load %arg1[%11] : memref<16xi32, #tpu.memory_space<smem>>
    %c1_i32_6 = arith.constant 1 : i32
    %c1_i32_7 = arith.constant 1 : i32
    %c0_i32_8 = arith.constant 0 : i32
    %c0_i32_9 = arith.constant 0 : i32
    %13 = tpu.memref_slice %arg4[%12, %c0_i32_8, %c0_i32_9] : memref<4x32x32xf32, #tpu.memory_space<any>> -> memref<1x32x32xf32, #tpu.memory_space<any>>
    %14 = tpu.memref_squeeze %13 : memref<1x32x32xf32, #tpu.memory_space<any>> -> memref<32x32xf32, #tpu.memory_space<any>>
    %c0_i32_10 = arith.constant 0 : i32
    %c0_i32_11 = arith.constant 0 : i32
    %15 = tpu.memref_slice %arg7[%c1_i32_6, %c0_i32_10, %c0_i32_11] : memref<8x32x32xf32, #tpu.memory_space<vmem>> -> memref<1x32x32xf32, #tpu.memory_space<vmem>>
    %16 = tpu.memref_squeeze %15 : memref<1x32x32xf32, #tpu.memory_space<vmem>> -> memref<32x32xf32, #tpu.memory_space<vmem>>
    %17 = tpu.memref_slice %arg8[%c1_i32_7] : memref<8x!tpu.dma_semaphore, #tpu.memory_space<semaphore_mem>> -> memref<1x!tpu.dma_semaphore, #tpu.memory_space<semaphore_mem>>
    %18 = tpu.memref_squeeze %17 : memref<1x!tpu.dma_semaphore, #tpu.memory_space<semaphore_mem>> -> memref<!tpu.dma_semaphore, #tpu.memory_space<semaphore_mem>>
    tpu.enqueue_dma source(%14 : memref<32x32xf32, #tpu.memory_space<any>>) target(%16 : memref<32x32xf32, #tpu.memory_space<vmem>>) target_semaphore(%18 : memref<!tpu.dma_semaphore, #tpu.memory_space<semaphore_mem>>)
    %c2_i32 = arith.constant 2 : i32
    %19 = arith.addi %0, %c2_i32 : i32
    %20 = arith.index_cast %19 : i32 to index
    %21 = memref.load %arg1[%20] : memref<16xi32, #tpu.memory_space<smem>>
    %c2_i32_12 = arith.constant 2 : i32
    %c2_i32_13 = arith.constant 2 : i32
    %c0_i32_14 = arith.constant 0 : i32
    %c0_i32_15 = arith.constant 0 : i32
    %22 = tpu.memref_slice %arg4[%21, %c0_i32_14, %c0_i32_15] : memref<4x32x32xf32, #tpu.memory_space<any>> -> memref<1x32x32xf32, #tpu.memory_space<any>>
    %23 = tpu.memref_squeeze %22 : memref<1x32x32xf32, #tpu.memory_space<any>> -> memref<32x32xf32, #tpu.memory_space<any>>
    %c0_i32_16 = arith.constant 0 : i32
    %c0_i32_17 = arith.constant 0 : i32
    %24 = tpu.memref_slice %arg7[%c2_i32_12, %c0_i32_16, %c0_i32_17] : memref<8x32x32xf32, #tpu.memory_space<vmem>> -> memref<1x32x32xf32, #tpu.memory_space<vmem>>
    %25 = tpu.memref_squeeze %24 : memref<1x32x32xf32, #tpu.memory_space<vmem>> -> memref<32x32xf32, #tpu.memory_space<vmem>>
    %26 = tpu.memref_slice %arg8[%c2_i32_13] : memref<8x!tpu.dma_semaphore, #tpu.memory_space<semaphore_mem>> -> memref<1x!tpu.dma_semaphore, #tpu.memory_space<semaphore_mem>>
    %27 = tpu.memref_squeeze %26 : memref<1x!tpu.dma_semaphore, #tpu.memory_space<semaphore_mem>> -> memref<!tpu.dma_semaphore, #tpu.memory_space<semaphore_mem>>
    tpu.enqueue_dma source(%23 : memref<32x32xf32, #tpu.memory_space<any>>) target(%25 : memref<32x32xf32, #tpu.memory_space<vmem>>) target_semaphore(%27 : memref<!tpu.dma_semaphore, #tpu.memory_space<semaphore_mem>>)
    %c3_i32 = arith.constant 3 : i32
    %28 = arith.addi %0, %c3_i32 : i32
    %29 = arith.index_cast %28 : i32 to index
    %30 = memref.load %arg1[%29] : memref<16xi32, #tpu.memory_space<smem>>
    %c3_i32_18 = arith.constant 3 : i32
    %c3_i32_19 = arith.constant 3 : i32
    %c0_i32_20 = arith.constant 0 : i32
    %c0_i32_21 = arith.constant 0 : i32
    %31 = tpu.memref_slice %arg4[%30, %c0_i32_20, %c0_i32_21] : memref<4x32x32xf32, #tpu.memory_space<any>> -> memref<1x32x32xf32, #tpu.memory_space<any>>
    %32 = tpu.memref_squeeze %31 : memref<1x32x32xf32, #tpu.memory_space<any>> -> memref<32x32xf32, #tpu.memory_space<any>>
    %c0_i32_22 = arith.constant 0 : i32
    %c0_i32_23 = arith.constant 0 : i32
    %33 = tpu.memref_slice %arg7[%c3_i32_18, %c0_i32_22, %c0_i32_23] : memref<8x32x32xf32, #tpu.memory_space<vmem>> -> memref<1x32x32xf32, #tpu.memory_space<vmem>>
    %34 = tpu.memref_squeeze %33 : memref<1x32x32xf32, #tpu.memory_space<vmem>> -> memref<32x32xf32, #tpu.memory_space<vmem>>
    %35 = tpu.memref_slice %arg8[%c3_i32_19] : memref<8x!tpu.dma_semaphore, #tpu.memory_space<semaphore_mem>> -> memref<1x!tpu.dma_semaphore, #tpu.memory_space<semaphore_mem>>
    %36 = tpu.memref_squeeze %35 : memref<1x!tpu.dma_semaphore, #tpu.memory_space<semaphore_mem>> -> memref<!tpu.dma_semaphore, #tpu.memory_space<semaphore_mem>>
    tpu.enqueue_dma source(%32 : memref<32x32xf32, #tpu.memory_space<any>>) target(%34 : memref<32x32xf32, #tpu.memory_space<vmem>>) target_semaphore(%36 : memref<!tpu.dma_semaphore, #tpu.memory_space<semaphore_mem>>)
    %c4_i32 = arith.constant 4 : i32
    %37 = arith.addi %0, %c4_i32 : i32
    %38 = arith.index_cast %37 : i32 to index
    %39 = memref.load %arg1[%38] : memref<16xi32, #tpu.memory_space<smem>>
    %c4_i32_24 = arith.constant 4 : i32
    %c4_i32_25 = arith.constant 4 : i32
    %c0_i32_26 = arith.constant 0 : i32
    %c0_i32_27 = arith.constant 0 : i32
    %40 = tpu.memref_slice %arg4[%39, %c0_i32_26, %c0_i32_27] : memref<4x32x32xf32, #tpu.memory_space<any>> -> memref<1x32x32xf32, #tpu.memory_space<any>>
    %41 = tpu.memref_squeeze %40 : memref<1x32x32xf32, #tpu.memory_space<any>> -> memref<32x32xf32, #tpu.memory_space<any>>
    %c0_i32_28 = arith.constant 0 : i32
    %c0_i32_29 = arith.constant 0 : i32
    %42 = tpu.memref_slice %arg7[%c4_i32_24, %c0_i32_28, %c0_i32_29] : memref<8x32x32xf32, #tpu.memory_space<vmem>> -> memref<1x32x32xf32, #tpu.memory_space<vmem>>
    %43 = tpu.memref_squeeze %42 : memref<1x32x32xf32, #tpu.memory_space<vmem>> -> memref<32x32xf32, #tpu.memory_space<vmem>>
    %44 = tpu.memref_slice %arg8[%c4_i32_25] : memref<8x!tpu.dma_semaphore, #tpu.memory_space<semaphore_mem>> -> memref<1x!tpu.dma_semaphore, #tpu.memory_space<semaphore_mem>>
    %45 = tpu.memref_squeeze %44 : memref<1x!tpu.dma_semaphore, #tpu.memory_space<semaphore_mem>> -> memref<!tpu.dma_semaphore, #tpu.memory_space<semaphore_mem>>
    tpu.enqueue_dma source(%41 : memref<32x32xf32, #tpu.memory_space<any>>) target(%43 : memref<32x32xf32, #tpu.memory_space<vmem>>) target_semaphore(%45 : memref<!tpu.dma_semaphore, #tpu.memory_space<semaphore_mem>>)
    %c5_i32 = arith.constant 5 : i32
    %46 = arith.addi %0, %c5_i32 : i32
    %47 = arith.index_cast %46 : i32 to index
    %48 = memref.load %arg1[%47] : memref<16xi32, #tpu.memory_space<smem>>
    %c5_i32_30 = arith.constant 5 : i32
    %c5_i32_31 = arith.constant 5 : i32
    %c0_i32_32 = arith.constant 0 : i32
    %c0_i32_33 = arith.constant 0 : i32
    %49 = tpu.memref_slice %arg4[%48, %c0_i32_32, %c0_i32_33] : memref<4x32x32xf32, #tpu.memory_space<any>> -> memref<1x32x32xf32, #tpu.memory_space<any>>
    %50 = tpu.memref_squeeze %49 : memref<1x32x32xf32, #tpu.memory_space<any>> -> memref<32x32xf32, #tpu.memory_space<any>>
    %c0_i32_34 = arith.constant 0 : i32
    %c0_i32_35 = arith.constant 0 : i32
    %51 = tpu.memref_slice %arg7[%c5_i32_30, %c0_i32_34, %c0_i32_35] : memref<8x32x32xf32, #tpu.memory_space<vmem>> -> memref<1x32x32xf32, #tpu.memory_space<vmem>>
    %52 = tpu.memref_squeeze %51 : memref<1x32x32xf32, #tpu.memory_space<vmem>> -> memref<32x32xf32, #tpu.memory_space<vmem>>
    %53 = tpu.memref_slice %arg8[%c5_i32_31] : memref<8x!tpu.dma_semaphore, #tpu.memory_space<semaphore_mem>> -> memref<1x!tpu.dma_semaphore, #tpu.memory_space<semaphore_mem>>
    %54 = tpu.memref_squeeze %53 : memref<1x!tpu.dma_semaphore, #tpu.memory_space<semaphore_mem>> -> memref<!tpu.dma_semaphore, #tpu.memory_space<semaphore_mem>>
    tpu.enqueue_dma source(%50 : memref<32x32xf32, #tpu.memory_space<any>>) target(%52 : memref<32x32xf32, #tpu.memory_space<vmem>>) target_semaphore(%54 : memref<!tpu.dma_semaphore, #tpu.memory_space<semaphore_mem>>)
    %c6_i32 = arith.constant 6 : i32
    %55 = arith.addi %0, %c6_i32 : i32
    %56 = arith.index_cast %55 : i32 to index
    %57 = memref.load %arg1[%56] : memref<16xi32, #tpu.memory_space<smem>>
    %c6_i32_36 = arith.constant 6 : i32
    %c6_i32_37 = arith.constant 6 : i32
    %c0_i32_38 = arith.constant 0 : i32
    %c0_i32_39 = arith.constant 0 : i32
    %58 = tpu.memref_slice %arg4[%57, %c0_i32_38, %c0_i32_39] : memref<4x32x32xf32, #tpu.memory_space<any>> -> memref<1x32x32xf32, #tpu.memory_space<any>>
    %59 = tpu.memref_squeeze %58 : memref<1x32x32xf32, #tpu.memory_space<any>> -> memref<32x32xf32, #tpu.memory_space<any>>
    %c0_i32_40 = arith.constant 0 : i32
    %c0_i32_41 = arith.constant 0 : i32
    %60 = tpu.memref_slice %arg7[%c6_i32_36, %c0_i32_40, %c0_i32_41] : memref<8x32x32xf32, #tpu.memory_space<vmem>> -> memref<1x32x32xf32, #tpu.memory_space<vmem>>
    %61 = tpu.memref_squeeze %60 : memref<1x32x32xf32, #tpu.memory_space<vmem>> -> memref<32x32xf32, #tpu.memory_space<vmem>>
    %62 = tpu.memref_slice %arg8[%c6_i32_37] : memref<8x!tpu.dma_semaphore, #tpu.memory_space<semaphore_mem>> -> memref<1x!tpu.dma_semaphore, #tpu.memory_space<semaphore_mem>>
    %63 = tpu.memref_squeeze %62 : memref<1x!tpu.dma_semaphore, #tpu.memory_space<semaphore_mem>> -> memref<!tpu.dma_semaphore, #tpu.memory_space<semaphore_mem>>
    tpu.enqueue_dma source(%59 : memref<32x32xf32, #tpu.memory_space<any>>) target(%61 : memref<32x32xf32, #tpu.memory_space<vmem>>) target_semaphore(%63 : memref<!tpu.dma_semaphore, #tpu.memory_space<semaphore_mem>>)
    %c7_i32 = arith.constant 7 : i32
    %64 = arith.addi %0, %c7_i32 : i32
    %65 = arith.index_cast %64 : i32 to index
    %66 = memref.load %arg1[%65] : memref<16xi32, #tpu.memory_space<smem>>
    %c7_i32_42 = arith.constant 7 : i32
    %c7_i32_43 = arith.constant 7 : i32
    %c0_i32_44 = arith.constant 0 : i32
    %c0_i32_45 = arith.constant 0 : i32
    %67 = tpu.memref_slice %arg4[%66, %c0_i32_44, %c0_i32_45] : memref<4x32x32xf32, #tpu.memory_space<any>> -> memref<1x32x32xf32, #tpu.memory_space<any>>
    %68 = tpu.memref_squeeze %67 : memref<1x32x32xf32, #tpu.memory_space<any>> -> memref<32x32xf32, #tpu.memory_space<any>>
    %c0_i32_46 = arith.constant 0 : i32
    %c0_i32_47 = arith.constant 0 : i32
    %69 = tpu.memref_slice %arg7[%c7_i32_42, %c0_i32_46, %c0_i32_47] : memref<8x32x32xf32, #tpu.memory_space<vmem>> -> memref<1x32x32xf32, #tpu.memory_space<vmem>>
    %70 = tpu.memref_squeeze %69 : memref<1x32x32xf32, #tpu.memory_space<vmem>> -> memref<32x32xf32, #tpu.memory_space<vmem>>
    %71 = tpu.memref_slice %arg8[%c7_i32_43] : memref<8x!tpu.dma_semaphore, #tpu.memory_space<semaphore_mem>> -> memref<1x!tpu.dma_semaphore, #tpu.memory_space<semaphore_mem>>
    %72 = tpu.memref_squeeze %71 : memref<1x!tpu.dma_semaphore, #tpu.memory_space<semaphore_mem>> -> memref<!tpu.dma_semaphore, #tpu.memory_space<semaphore_mem>>
    tpu.enqueue_dma source(%68 : memref<32x32xf32, #tpu.memory_space<any>>) target(%70 : memref<32x32xf32, #tpu.memory_space<vmem>>) target_semaphore(%72 : memref<!tpu.dma_semaphore, #tpu.memory_space<semaphore_mem>>)
    %c0 = arith.constant 0 : index
    %c0_48 = arith.constant 0 : index
    %c0_49 = arith.constant 0 : index
    %73 = vector.load %arg2[%c0, %c0_48, %c0_49] : memref<8x8x32xf32, #tpu.memory_space<vmem>>, vector<8x8x32xf32>
    %c0_50 = arith.constant 0 : index
    %c0_51 = arith.constant 0 : index
    %c0_52 = arith.constant 0 : index
    %74 = vector.load %arg3[%c0_50, %c0_51, %c0_52] : memref<8x8x32xf32, #tpu.memory_space<vmem>>, vector<8x8x32xf32>
    %75 = arith.mulf %73, %73 : vector<8x8x32xf32>
    %cst = arith.constant dense<0.000000e+00> : vector<8x8xf32>
    %76 = vector.multi_reduction <add>, %75, %cst [2] : vector<8x8x32xf32> to vector<8x8xf32>
    %77 = vector.shape_cast %76 : vector<8x8xf32> to vector<8x8x1xf32>
    %78 = math.sqrt %77 : vector<8x8x1xf32>
    %79 = arith.mulf %74, %74 : vector<8x8x32xf32>
    %cst_53 = arith.constant dense<0.000000e+00> : vector<8x8xf32>
    %80 = vector.multi_reduction <add>, %79, %cst_53 [2] : vector<8x8x32xf32> to vector<8x8xf32>
    %81 = vector.shape_cast %80 : vector<8x8xf32> to vector<8x8x1xf32>
    %82 = math.sqrt %81 : vector<8x8x1xf32>
    %cst_54 = arith.constant 9.99999996E-13 : f32
    %83 = vector.broadcast %cst_54 : f32 to vector<8x8x1xf32>
    %84 = arith.maximumf %78, %83 : vector<8x8x1xf32>
    %85 = tpu.reciprocal %84 {approx = true} : vector<8x8x1xf32> -> vector<8x8x1xf32>
    %cst_55 = arith.constant 9.99999996E-13 : f32
    %86 = vector.broadcast %cst_55 : f32 to vector<8x8x1xf32>
    %87 = arith.maximumf %82, %86 : vector<8x8x1xf32>
    %88 = tpu.reciprocal %87 {approx = true} : vector<8x8x1xf32> -> vector<8x8x1xf32>
    %c0_i32_56 = arith.constant 0 : i32
    %c0_i32_57 = arith.constant 0 : i32
    %c0_i32_58 = arith.constant 0 : i32
    %c0_i32_59 = arith.constant 0 : i32
    %c0_i32_60 = arith.constant 0 : i32
    %89 = tpu.memref_slice %arg4[%c0_i32_56, %c0_i32_59, %c0_i32_60] : memref<4x32x32xf32, #tpu.memory_space<any>> -> memref<1x32x32xf32, #tpu.memory_space<any>>
    %90 = tpu.memref_squeeze %89 : memref<1x32x32xf32, #tpu.memory_space<any>> -> memref<32x32xf32, #tpu.memory_space<any>>
    %c0_i32_61 = arith.constant 0 : i32
    %c0_i32_62 = arith.constant 0 : i32
    %91 = tpu.memref_slice %arg7[%c0_i32_57, %c0_i32_61, %c0_i32_62] : memref<8x32x32xf32, #tpu.memory_space<vmem>> -> memref<1x32x32xf32, #tpu.memory_space<vmem>>
    %92 = tpu.memref_squeeze %91 : memref<1x32x32xf32, #tpu.memory_space<vmem>> -> memref<32x32xf32, #tpu.memory_space<vmem>>
    %93 = tpu.memref_slice %arg8[%c0_i32_58] : memref<8x!tpu.dma_semaphore, #tpu.memory_space<semaphore_mem>> -> memref<1x!tpu.dma_semaphore, #tpu.memory_space<semaphore_mem>>
    %94 = tpu.memref_squeeze %93 : memref<1x!tpu.dma_semaphore, #tpu.memory_space<semaphore_mem>> -> memref<!tpu.dma_semaphore, #tpu.memory_space<semaphore_mem>>
    tpu.wait_dma2 semaphore(%94 : memref<!tpu.dma_semaphore, #tpu.memory_space<semaphore_mem>>) src(%90 : memref<32x32xf32, #tpu.memory_space<any>>) dst(%92 : memref<32x32xf32, #tpu.memory_space<vmem>>)
    %c0_i32_63 = arith.constant 0 : i32
    %c1_i32_64 = arith.constant 1 : i32
    %c1_i32_65 = arith.constant 1 : i32
    %c0_i32_66 = arith.constant 0 : i32
    %c0_i32_67 = arith.constant 0 : i32
    %95 = tpu.memref_slice %arg4[%c0_i32_63, %c0_i32_66, %c0_i32_67] : memref<4x32x32xf32, #tpu.memory_space<any>> -> memref<1x32x32xf32, #tpu.memory_space<any>>
    %96 = tpu.memref_squeeze %95 : memref<1x32x32xf32, #tpu.memory_space<any>> -> memref<32x32xf32, #tpu.memory_space<any>>
    %c0_i32_68 = arith.constant 0 : i32
    %c0_i32_69 = arith.constant 0 : i32
    %97 = tpu.memref_slice %arg7[%c1_i32_64, %c0_i32_68, %c0_i32_69] : memref<8x32x32xf32, #tpu.memory_space<vmem>> -> memref<1x32x32xf32, #tpu.memory_space<vmem>>
    %98 = tpu.memref_squeeze %97 : memref<1x32x32xf32, #tpu.memory_space<vmem>> -> memref<32x32xf32, #tpu.memory_space<vmem>>
    %99 = tpu.memref_slice %arg8[%c1_i32_65] : memref<8x!tpu.dma_semaphore, #tpu.memory_space<semaphore_mem>> -> memref<1x!tpu.dma_semaphore, #tpu.memory_space<semaphore_mem>>
    %100 = tpu.memref_squeeze %99 : memref<1x!tpu.dma_semaphore, #tpu.memory_space<semaphore_mem>> -> memref<!tpu.dma_semaphore, #tpu.memory_space<semaphore_mem>>
    tpu.wait_dma2 semaphore(%100 : memref<!tpu.dma_semaphore, #tpu.memory_space<semaphore_mem>>) src(%96 : memref<32x32xf32, #tpu.memory_space<any>>) dst(%98 : memref<32x32xf32, #tpu.memory_space<vmem>>)
    %c0_i32_70 = arith.constant 0 : i32
    %c2_i32_71 = arith.constant 2 : i32
    %c2_i32_72 = arith.constant 2 : i32
    %c0_i32_73 = arith.constant 0 : i32
    %c0_i32_74 = arith.constant 0 : i32
    %101 = tpu.memref_slice %arg4[%c0_i32_70, %c0_i32_73, %c0_i32_74] : memref<4x32x32xf32, #tpu.memory_space<any>> -> memref<1x32x32xf32, #tpu.memory_space<any>>
    %102 = tpu.memref_squeeze %101 : memref<1x32x32xf32, #tpu.memory_space<any>> -> memref<32x32xf32, #tpu.memory_space<any>>
    %c0_i32_75 = arith.constant 0 : i32
    %c0_i32_76 = arith.constant 0 : i32
    %103 = tpu.memref_slice %arg7[%c2_i32_71, %c0_i32_75, %c0_i32_76] : memref<8x32x32xf32, #tpu.memory_space<vmem>> -> memref<1x32x32xf32, #tpu.memory_space<vmem>>
    %104 = tpu.memref_squeeze %103 : memref<1x32x32xf32, #tpu.memory_space<vmem>> -> memref<32x32xf32, #tpu.memory_space<vmem>>
    %105 = tpu.memref_slice %arg8[%c2_i32_72] : memref<8x!tpu.dma_semaphore, #tpu.memory_space<semaphore_mem>> -> memref<1x!tpu.dma_semaphore, #tpu.memory_space<semaphore_mem>>
    %106 = tpu.memref_squeeze %105 : memref<1x!tpu.dma_semaphore, #tpu.memory_space<semaphore_mem>> -> memref<!tpu.dma_semaphore, #tpu.memory_space<semaphore_mem>>
    tpu.wait_dma2 semaphore(%106 : memref<!tpu.dma_semaphore, #tpu.memory_space<semaphore_mem>>) src(%102 : memref<32x32xf32, #tpu.memory_space<any>>) dst(%104 : memref<32x32xf32, #tpu.memory_space<vmem>>)
    %c0_i32_77 = arith.constant 0 : i32
    %c3_i32_78 = arith.constant 3 : i32
    %c3_i32_79 = arith.constant 3 : i32
    %c0_i32_80 = arith.constant 0 : i32
    %c0_i32_81 = arith.constant 0 : i32
    %107 = tpu.memref_slice %arg4[%c0_i32_77, %c0_i32_80, %c0_i32_81] : memref<4x32x32xf32, #tpu.memory_space<any>> -> memref<1x32x32xf32, #tpu.memory_space<any>>
    %108 = tpu.memref_squeeze %107 : memref<1x32x32xf32, #tpu.memory_space<any>> -> memref<32x32xf32, #tpu.memory_space<any>>
    %c0_i32_82 = arith.constant 0 : i32
    %c0_i32_83 = arith.constant 0 : i32
    %109 = tpu.memref_slice %arg7[%c3_i32_78, %c0_i32_82, %c0_i32_83] : memref<8x32x32xf32, #tpu.memory_space<vmem>> -> memref<1x32x32xf32, #tpu.memory_space<vmem>>
    %110 = tpu.memref_squeeze %109 : memref<1x32x32xf32, #tpu.memory_space<vmem>> -> memref<32x32xf32, #tpu.memory_space<vmem>>
    %111 = tpu.memref_slice %arg8[%c3_i32_79] : memref<8x!tpu.dma_semaphore, #tpu.memory_space<semaphore_mem>> -> memref<1x!tpu.dma_semaphore, #tpu.memory_space<semaphore_mem>>
    %112 = tpu.memref_squeeze %111 : memref<1x!tpu.dma_semaphore, #tpu.memory_space<semaphore_mem>> -> memref<!tpu.dma_semaphore, #tpu.memory_space<semaphore_mem>>
    tpu.wait_dma2 semaphore(%112 : memref<!tpu.dma_semaphore, #tpu.memory_space<semaphore_mem>>) src(%108 : memref<32x32xf32, #tpu.memory_space<any>>) dst(%110 : memref<32x32xf32, #tpu.memory_space<vmem>>)
    %c0_i32_84 = arith.constant 0 : i32
    %c4_i32_85 = arith.constant 4 : i32
    %c4_i32_86 = arith.constant 4 : i32
    %c0_i32_87 = arith.constant 0 : i32
    %c0_i32_88 = arith.constant 0 : i32
    %113 = tpu.memref_slice %arg4[%c0_i32_84, %c0_i32_87, %c0_i32_88] : memref<4x32x32xf32, #tpu.memory_space<any>> -> memref<1x32x32xf32, #tpu.memory_space<any>>
    %114 = tpu.memref_squeeze %113 : memref<1x32x32xf32, #tpu.memory_space<any>> -> memref<32x32xf32, #tpu.memory_space<any>>
    %c0_i32_89 = arith.constant 0 : i32
    %c0_i32_90 = arith.constant 0 : i32
    %115 = tpu.memref_slice %arg7[%c4_i32_85, %c0_i32_89, %c0_i32_90] : memref<8x32x32xf32, #tpu.memory_space<vmem>> -> memref<1x32x32xf32, #tpu.memory_space<vmem>>
    %116 = tpu.memref_squeeze %115 : memref<1x32x32xf32, #tpu.memory_space<vmem>> -> memref<32x32xf32, #tpu.memory_space<vmem>>
    %117 = tpu.memref_slice %arg8[%c4_i32_86] : memref<8x!tpu.dma_semaphore, #tpu.memory_space<semaphore_mem>> -> memref<1x!tpu.dma_semaphore, #tpu.memory_space<semaphore_mem>>
    %118 = tpu.memref_squeeze %117 : memref<1x!tpu.dma_semaphore, #tpu.memory_space<semaphore_mem>> -> memref<!tpu.dma_semaphore, #tpu.memory_space<semaphore_mem>>
    tpu.wait_dma2 semaphore(%118 : memref<!tpu.dma_semaphore, #tpu.memory_space<semaphore_mem>>) src(%114 : memref<32x32xf32, #tpu.memory_space<any>>) dst(%116 : memref<32x32xf32, #tpu.memory_space<vmem>>)
    %c0_i32_91 = arith.constant 0 : i32
    %c5_i32_92 = arith.constant 5 : i32
    %c5_i32_93 = arith.constant 5 : i32
    %c0_i32_94 = arith.constant 0 : i32
    %c0_i32_95 = arith.constant 0 : i32
    %119 = tpu.memref_slice %arg4[%c0_i32_91, %c0_i32_94, %c0_i32_95] : memref<4x32x32xf32, #tpu.memory_space<any>> -> memref<1x32x32xf32, #tpu.memory_space<any>>
    %120 = tpu.memref_squeeze %119 : memref<1x32x32xf32, #tpu.memory_space<any>> -> memref<32x32xf32, #tpu.memory_space<any>>
    %c0_i32_96 = arith.constant 0 : i32
    %c0_i32_97 = arith.constant 0 : i32
    %121 = tpu.memref_slice %arg7[%c5_i32_92, %c0_i32_96, %c0_i32_97] : memref<8x32x32xf32, #tpu.memory_space<vmem>> -> memref<1x32x32xf32, #tpu.memory_space<vmem>>
    %122 = tpu.memref_squeeze %121 : memref<1x32x32xf32, #tpu.memory_space<vmem>> -> memref<32x32xf32, #tpu.memory_space<vmem>>
    %123 = tpu.memref_slice %arg8[%c5_i32_93] : memref<8x!tpu.dma_semaphore, #tpu.memory_space<semaphore_mem>> -> memref<1x!tpu.dma_semaphore, #tpu.memory_space<semaphore_mem>>
    %124 = tpu.memref_squeeze %123 : memref<1x!tpu.dma_semaphore, #tpu.memory_space<semaphore_mem>> -> memref<!tpu.dma_semaphore, #tpu.memory_space<semaphore_mem>>
    tpu.wait_dma2 semaphore(%124 : memref<!tpu.dma_semaphore, #tpu.memory_space<semaphore_mem>>) src(%120 : memref<32x32xf32, #tpu.memory_space<any>>) dst(%122 : memref<32x32xf32, #tpu.memory_space<vmem>>)
    %c0_i32_98 = arith.constant 0 : i32
    %c6_i32_99 = arith.constant 6 : i32
    %c6_i32_100 = arith.constant 6 : i32
    %c0_i32_101 = arith.constant 0 : i32
    %c0_i32_102 = arith.constant 0 : i32
    %125 = tpu.memref_slice %arg4[%c0_i32_98, %c0_i32_101, %c0_i32_102] : memref<4x32x32xf32, #tpu.memory_space<any>> -> memref<1x32x32xf32, #tpu.memory_space<any>>
    %126 = tpu.memref_squeeze %125 : memref<1x32x32xf32, #tpu.memory_space<any>> -> memref<32x32xf32, #tpu.memory_space<any>>
    %c0_i32_103 = arith.constant 0 : i32
    %c0_i32_104 = arith.constant 0 : i32
    %127 = tpu.memref_slice %arg7[%c6_i32_99, %c0_i32_103, %c0_i32_104] : memref<8x32x32xf32, #tpu.memory_space<vmem>> -> memref<1x32x32xf32, #tpu.memory_space<vmem>>
    %128 = tpu.memref_squeeze %127 : memref<1x32x32xf32, #tpu.memory_space<vmem>> -> memref<32x32xf32, #tpu.memory_space<vmem>>
    %129 = tpu.memref_slice %arg8[%c6_i32_100] : memref<8x!tpu.dma_semaphore, #tpu.memory_space<semaphore_mem>> -> memref<1x!tpu.dma_semaphore, #tpu.memory_space<semaphore_mem>>
    %130 = tpu.memref_squeeze %129 : memref<1x!tpu.dma_semaphore, #tpu.memory_space<semaphore_mem>> -> memref<!tpu.dma_semaphore, #tpu.memory_space<semaphore_mem>>
    tpu.wait_dma2 semaphore(%130 : memref<!tpu.dma_semaphore, #tpu.memory_space<semaphore_mem>>) src(%126 : memref<32x32xf32, #tpu.memory_space<any>>) dst(%128 : memref<32x32xf32, #tpu.memory_space<vmem>>)
    %c0_i32_105 = arith.constant 0 : i32
    %c7_i32_106 = arith.constant 7 : i32
    %c7_i32_107 = arith.constant 7 : i32
    %c0_i32_108 = arith.constant 0 : i32
    %c0_i32_109 = arith.constant 0 : i32
    %131 = tpu.memref_slice %arg4[%c0_i32_105, %c0_i32_108, %c0_i32_109] : memref<4x32x32xf32, #tpu.memory_space<any>> -> memref<1x32x32xf32, #tpu.memory_space<any>>
    %132 = tpu.memref_squeeze %131 : memref<1x32x32xf32, #tpu.memory_space<any>> -> memref<32x32xf32, #tpu.memory_space<any>>
    %c0_i32_110 = arith.constant 0 : i32
    %c0_i32_111 = arith.constant 0 : i32
    %133 = tpu.memref_slice %arg7[%c7_i32_106, %c0_i32_110, %c0_i32_111] : memref<8x32x32xf32, #tpu.memory_space<vmem>> -> memref<1x32x32xf32, #tpu.memory_space<vmem>>
    %134 = tpu.memref_squeeze %133 : memref<1x32x32xf32, #tpu.memory_space<vmem>> -> memref<32x32xf32, #tpu.memory_space<vmem>>
    %135 = tpu.memref_slice %arg8[%c7_i32_107] : memref<8x!tpu.dma_semaphore, #tpu.memory_space<semaphore_mem>> -> memref<1x!tpu.dma_semaphore, #tpu.memory_space<semaphore_mem>>
    %136 = tpu.memref_squeeze %135 : memref<1x!tpu.dma_semaphore, #tpu.memory_space<semaphore_mem>> -> memref<!tpu.dma_semaphore, #tpu.memory_space<semaphore_mem>>
    tpu.wait_dma2 semaphore(%136 : memref<!tpu.dma_semaphore, #tpu.memory_space<semaphore_mem>>) src(%132 : memref<32x32xf32, #tpu.memory_space<any>>) dst(%134 : memref<32x32xf32, #tpu.memory_space<vmem>>)
    %c0_112 = arith.constant 0 : index
    %c0_113 = arith.constant 0 : index
    %c0_114 = arith.constant 0 : index
    %137 = vector.load %arg7[%c0_112, %c0_113, %c0_114] : memref<8x32x32xf32, #tpu.memory_space<vmem>>, vector<8x32x32xf32>
    %138 = arith.mulf %137, %137 : vector<8x32x32xf32>
    %cst_115 = arith.constant dense<0.000000e+00> : vector<8x32xf32>
    %139 = vector.multi_reduction <add>, %138, %cst_115 [2] : vector<8x32x32xf32> to vector<8x32xf32>
    %cst_116 = arith.constant dense<0.000000e+00> : vector<8xf32>
    %140 = vector.multi_reduction <add>, %139, %cst_116 [1] : vector<8x32xf32> to vector<8xf32>
    %141 = vector.shape_cast %140 : vector<8xf32> to vector<8x1xf32>
    %142 = math.sqrt %141 : vector<8x1xf32>
    %cst_117 = arith.constant 9.99999996E-13 : f32
    %143 = vector.broadcast %cst_117 : f32 to vector<8x1xf32>
    %144 = arith.maximumf %142, %143 : vector<8x1xf32>
    %145 = tpu.reciprocal %144 {approx = true} : vector<8x1xf32> -> vector<8x1xf32>
    %146 = arith.truncf %137 : vector<8x32x32xf32> to vector<8x32x32xbf16>
    %147 = vector.broadcast %85 : vector<8x8x1xf32> to vector<8x8x32xf32>
    %148 = arith.mulf %73, %147 : vector<8x8x32xf32>
    %149 = arith.truncf %148 : vector<8x8x32xf32> to vector<8x8x32xbf16>
    %150 = vector.broadcast %88 : vector<8x8x1xf32> to vector<8x8x32xf32>
    %151 = arith.mulf %74, %150 : vector<8x8x32xf32>
    %152 = arith.truncf %151 : vector<8x8x32xf32> to vector<8x8x32xbf16>
    "tpu.trace_start"() <{level = 10 : i32, message = "bnd,bde->bne"}> : () -> ()
    %cst_118 = arith.constant dense<0.000000e+00> : vector<8x8x32xf32>
    %153 = tpu.matmul %149, %146, %cst_118 {dimension_numbers = #tpu.dot_dimension_numbers<[2], [1], [1], [2], [0, 0, 0, 1, 1, 2], [0], [0]>} : vector<8x8x32xbf16>, vector<8x32x32xbf16>, vector<8x8x32xf32> -> vector<8x8x32xf32>
    "tpu.trace_stop"() : () -> ()
    %154 = arith.truncf %153 : vector<8x8x32xf32> to vector<8x8x32xbf16>
    "tpu.trace_start"() <{level = 10 : i32, message = "bne,bme->bnm"}> : () -> ()
    %cst_119 = arith.constant dense<0.000000e+00> : vector<8x8x8xf32>
    %155 = tpu.matmul %154, %152, %cst_119 {dimension_numbers = #tpu.dot_dimension_numbers<[2], [2], [1], [1], [0, 0, 0, 1, 1, 1], [0], [0]>} : vector<8x8x32xbf16>, vector<8x8x32xbf16>, vector<8x8x8xf32> -> vector<8x8x8xf32>
    "tpu.trace_stop"() : () -> ()
    %c0_120 = arith.constant 0 : index
    %c0_121 = arith.constant 0 : index
    %c0_122 = arith.constant 0 : index
    %156 = vector.load %arg5[%c0_120, %c0_121, %c0_122] : memref<8x8x8xf32, #tpu.memory_space<vmem>>, vector<8x8x8xf32>
    %157 = arith.mulf %156, %155 : vector<8x8x8xf32>
    %cst_123 = arith.constant dense<0.000000e+00> : vector<8x8xf32>
    %158 = vector.multi_reduction <add>, %157, %cst_123 [2] : vector<8x8x8xf32> to vector<8x8xf32>
    %cst_124 = arith.constant dense<0.000000e+00> : vector<8xf32>
    %159 = vector.multi_reduction <add>, %158, %cst_124 [1] : vector<8x8xf32> to vector<8xf32>
    %160 = vector.shape_cast %159 : vector<8xf32> to vector<8x1xf32>
    %161 = arith.mulf %160, %145 : vector<8x1xf32>
    %c0_125 = arith.constant 0 : index
    %c0_126 = arith.constant 0 : index
    %162 = vector.load %arg6[%c0_125, %c0_126] : memref<8x1xf32, #tpu.memory_space<vmem>>, vector<8x1xf32>
    tpu.vector_store %arg6[%c0_125, %c0_126], %161 {strides = array<i32>} : memref<8x1xf32, #tpu.memory_space<vmem>>, vector<8x1xf32>,
    return
  }
  func.func @transform_0(%arg0: i32, %arg1: memref<16xi32, #tpu.memory_space<smem>>) -> (i32, i32, i32) {
    %c0_i32 = arith.constant 0 : i32
    %c0_i32_0 = arith.constant 0 : i32
    %c0_i32_1 = arith.constant 0 : i32
    return %arg0, %c0_i32, %c0_i32_0 : i32, i32, i32
  }
  func.func @transform_1(%arg0: i32, %arg1: memref<16xi32, #tpu.memory_space<smem>>) -> (i32, i32, i32) {
    %c0_i32 = arith.constant 0 : i32
    %c0_i32_0 = arith.constant 0 : i32
    %c0_i32_1 = arith.constant 0 : i32
    return %arg0, %c0_i32, %c0_i32_0 : i32, i32, i32
  }
  func.func @transform_3(%arg0: i32, %arg1: memref<16xi32, #tpu.memory_space<smem>>) -> (i32, i32, i32) {
    %c0_i32 = arith.constant 0 : i32
    %c0_i32_0 = arith.constant 0 : i32
    %c0_i32_1 = arith.constant 0 : i32
    return %arg0, %c0_i32, %c0_i32_0 : i32, i32, i32
  }
  func.func @transform_4(%arg0: i32, %arg1: memref<16xi32, #tpu.memory_space<smem>>) -> (i32, i32) {
    %c0_i32 = arith.constant 0 : i32
    %c0_i32_0 = arith.constant 0 : i32
    return %arg0, %c0_i32 : i32, i32
  }
}

</mosaic_0001>

<llo_original>
// kernel: tpu_custom_call.1
$region0: #{tpu_custom_call.1}
  #allocation0 [shape = 'u32[]', space=smem, size = 0x4, offset = 0x4, fixed_abs, tag = 'smem constant byte address 0x4 - core index']
  #allocation1 [shape = 'u32[72,128]{1,0:T(1,128)}', space=vmem, size = 0x9000, scoped, tag = 'internal scratch']
  #allocation2 [shape = 'f32[8,32,32]{2,1,0:T(8,128)}', space=vmem, size = 0x20000, scoped, tag = 'scratch operand']
  #allocation3 [shape = 's32[8]{0}', space=sflag, size = 0x20, scoped, tag = 'scratch operand']
  #allocation4 [shape = 's32[1]{0}', space=sflag, size = 0x4, scoped, tag = 'scoped memory for tpu_custom_call.1']
  #allocation5 [shape = 'u8[512]{0}', space=smem, size = 0x200, scoped, tag = 'prefetched SMEM operand 0']
  #allocation8 [shape = 's32[]', space=sflag, size = 0x4, offset = 0, fixed_abs, tag = 'sflag constant byte address 0x0 - dummy sync flag']
  #allocation9 [shape = 's32[]', space=sflag, size = 0x4, offset = 0, fixed_abs, tag = 'sflag constant byte address 0x0 - dummy sync flag']
  #allocation10 [shape = 'u32[]', space=smem, size = 0x4, offset = 0x44, fixed_abs, tag = 'smem constant byte address 0x44 - assertion arg 0']
  #allocation11 [shape = 'u32[]', space=smem, size = 0x4, offset = 0x48, fixed_abs, tag = 'smem constant byte address 0x48 - assertion arg 1']
  #allocation12 [shape = 's32[]', space=sflag, size = 0x4, offset = 0, fixed_abs, tag = 'sflag constant byte address 0x0 - dummy sync flag']
  #allocation13 [shape = 's32[]', space=sflag, size = 0x4, offset = 0, fixed_abs, tag = 'sflag constant byte address 0x0 - dummy sync flag']
  #allocation14 [shape = 's32[]', space=sflag, size = 0x4, offset = 0, fixed_abs, tag = 'sflag constant byte address 0x0 - dummy sync flag']
  #allocation15 [shape = 's32[]', space=sflag, size = 0x4, offset = 0, fixed_abs, tag = 'sflag constant byte address 0x0 - dummy sync flag']
  #allocation16 [shape = 's32[]', space=sflag, size = 0x4, offset = 0, fixed_abs, tag = 'sflag constant byte address 0x0 - dummy sync flag']
  #allocation17 [shape = 's32[]', space=sflag, size = 0x4, offset = 0, fixed_abs, tag = 'sflag constant byte address 0x0 - dummy sync flag']
  #allocation18 [shape = 's32[]', space=sflag, size = 0x4, offset = 0, fixed_abs, tag = 'sflag constant byte address 0x0 - dummy sync flag']
  #allocation19 [shape = 's32[]', space=sflag, size = 0x4, offset = 0, fixed_abs, tag = 'sflag constant byte address 0x0 - dummy sync flag']
  #allocation20 [shape = 's32[]', space=sflag, size = 0x4, offset = 0, fixed_abs, tag = 'sflag constant byte address 0x0 - dummy sync flag']
  #allocation21 [shape = 's32[]', space=sflag, size = 0x4, offset = 0, fixed_abs, tag = 'sflag constant byte address 0x0 - dummy sync flag']
  #allocation22 [shape = 's32[]', space=sflag, size = 0x4, offset = 0, fixed_abs, tag = 'sflag constant byte address 0x0 - dummy sync flag']
  #allocation23 [shape = 's32[]', space=sflag, size = 0x4, offset = 0, fixed_abs, tag = 'sflag constant byte address 0x0 - dummy sync flag']
  #allocation24 [shape = 's32[]', space=sflag, size = 0x4, offset = 0, fixed_abs, tag = 'sflag constant byte address 0x0 - dummy sync flag']
  #allocation25 [shape = 's32[]', space=sflag, size = 0x4, offset = 0, fixed_abs, tag = 'sflag constant byte address 0x0 - dummy sync flag']
  %s0 = inlined_call_operand.vmem [shape: s32[16], index: 0, kind: input, shape index: {}]
  %s1 = inlined_call_operand.vmem [shape: f32[16,8,32], index: 1, kind: input, shape index: {}]
  %s2 = inlined_call_operand.hbm [shape: f32[16,8,32], index: 2, kind: input, shape index: {}]
  %s3 = inlined_call_operand.hbm [shape: f32[4,32,32], index: 3, kind: input, shape index: {}]
  %s4 = inlined_call_operand.vmem [shape: f32[16,8,8], index: 4, kind: input, shape index: {}]
  %s5 = inlined_call_operand.vmem [shape: f32[16,1], index: 5, kind: output, shape index: {}]
  %s6 = sld [smem:[#allocation0]]
  $region81: #{tpu_custom_call.1} parent=0
    _
  %s8 = ssub.s32 1, %s6
  %s9 = scalar_select 0, %s8, %s6
  %s11 = sshll.u32 %s0, 4
  %s12 = int_to_ptr.vmem [resolvable:$true] %s11
  %14 = dma.vmem_to_smem %s12, 16, [#allocation5], [#allocation4]
  %16 = dma.done [#allocation4], 16
  %17 = sfence
  $region1: #{tpu_custom_call.1} parent=0
    #allocation6 [shape = 'u8[65536]{0}', space=vmem, size = 0x10000, scoped, tag = 'input window, operand 2']
    #allocation7 [shape = 's32[2]{0}', space=sflag, size = 0x8, scoped, tag = 'scoped memory for tpu_custom_call.1']
    %18 = vsyncpa [#allocation7], 0
    %s19 = scalar_lea.sflag [#allocation7], 1
    %20 = vsyncpa %s19, 0
    loop: start=0, step=1, limit=4
    $region2: #{tpu_custom_call.1} parent=1 // loop_pre_header
      _
    $region3: #{tpu_custom_call.1} parent=1 // loop_header
      %s22 = sphi 0, %s26
      %p23 = scmp.ge.s32.totalorder %s22, 4
      %s32 = sphi 0, %s34
      %s35 = sphi 0, %s32
      %s36 = sphi 0, %s35
      %s52 = sphi 0, %s36
      %s58 = sphi 0, %s60
      %s61 = sphi 0, %s58
      %s62 = sphi 0, %s61
      %s78 = sphi 0, %s62
      %s84 = sphi 0, %s86
      %s87 = sphi 0, %s84
      %s88 = sphi 0, %s87
      %s104 = sphi 0, %s88
      %s110 = sphi 0, %s112
      %s113 = sphi 0, %s110
      %s114 = sphi 0, %s113
      %s130 = sphi 0, %s114
    $region4: #{tpu_custom_call.1} parent=1 // loop_header_branch
      %25 = sbr.rel (%p23) target = $region8
    $region5: #{tpu_custom_call.1} parent=1 // loop_body
      %s27 = ssub.s32 %s22, 1
      %s28 = ssub.s32 %s22, 2
      %s29 = sadd.s32 %s22, 1
      %s30 = ssub.s32 %s22, %s29
      %p31 = scmp.eq.s32.totalorder %s30, 0
      %s33 = sadd.s32 %s32, 1
      %s34 = scalar_select %p31, %s32, %s33
      %p37 = pneg %p31
      %p38 = scmp.eq.s32.totalorder %s22, 1
      %p39 = por %p37, %p38
      %p40 = scmp.ne.s32.totalorder %s32, %s35
      %p41 = scmp.eq.s32.totalorder %s22, 0
      %p42 = por %p40, %p41
      %p43 = scmp.ne.s32.totalorder %s32, %s35
      %p44 = scmp.eq.s32.totalorder %s27, 1
      %p45 = por %p43, %p44
      %p46 = scmp.ne.s32.totalorder %s35, %s36
      %p47 = scmp.eq.s32.totalorder %s27, 0
      %p48 = por %p46, %p47
      %p49 = scmp.ne.s32.totalorder %s35, %s36
      %p50 = scmp.eq.s32.totalorder %s28, 1
      %p51 = por %p49, %p50
      %p53 = scmp.ne.s32.totalorder %s36, %s52
      %p54 = scmp.eq.s32.totalorder %s28, 0
      %p55 = por %p53, %p54
      %s56 = ssub.s32 %s22, %s29
      %p57 = scmp.eq.s32.totalorder %s56, 0
      %s59 = sadd.s32 %s58, 1
      %s60 = scalar_select %p57, %s58, %s59
      %p63 = pneg %p57
      %p64 = scmp.eq.s32.totalorder %s22, 1
      %p65 = por %p63, %p64
      %p66 = scmp.ne.s32.totalorder %s58, %s61
      %p67 = scmp.eq.s32.totalorder %s22, 0
      %p68 = por %p66, %p67
      %p69 = scmp.ne.s32.totalorder %s58, %s61
      %p70 = scmp.eq.s32.totalorder %s27, 1
      %p71 = por %p69, %p70
      %p72 = scmp.ne.s32.totalorder %s61, %s62
      %p73 = scmp.eq.s32.totalorder %s27, 0
      %p74 = por %p72, %p73
      %p75 = scmp.ne.s32.totalorder %s61, %s62
      %p76 = scmp.eq.s32.totalorder %s28, 1
      %p77 = por %p75, %p76
      %p79 = scmp.ne.s32.totalorder %s62, %s78
      %p80 = scmp.eq.s32.totalorder %s28, 0
      %p81 = por %p79, %p80
      %s82 = ssub.s32 %s22, %s29
      %p83 = scmp.eq.s32.totalorder %s82, 0
      %s85 = sadd.s32 %s84, 1
      %s86 = scalar_select %p83, %s84, %s85
      %p89 = pneg %p83
      %p90 = scmp.eq.s32.totalorder %s22, 1
      %p91 = por %p89, %p90
      %p92 = scmp.ne.s32.totalorder %s84, %s87
      %p93 = scmp.eq.s32.totalorder %s22, 0
      %p94 = por %p92, %p93
      %p95 = scmp.ne.s32.totalorder %s84, %s87
      %p96 = scmp.eq.s32.totalorder %s27, 1
      %p97 = por %p95, %p96
      %p98 = scmp.ne.s32.totalorder %s87, %s88
      %p99 = scmp.eq.s32.totalorder %s27, 0
      %p100 = por %p98, %p99
      %p101 = scmp.ne.s32.totalorder %s87, %s88
      %p102 = scmp.eq.s32.totalorder %s28, 1
      %p103 = por %p101, %p102
      %p105 = scmp.ne.s32.totalorder %s88, %s104
      %p106 = scmp.eq.s32.totalorder %s28, 0
      %p107 = por %p105, %p106
      %s108 = ssub.s32 %s22, %s29
      %p109 = scmp.eq.s32.totalorder %s108, 0
      %s111 = sadd.s32 %s110, 1
      %s112 = scalar_select %p109, %s110, %s111
      %p115 = pneg %p109
      %p116 = scmp.eq.s32.totalorder %s22, 1
      %p117 = por %p115, %p116
      %p118 = scmp.ne.s32.totalorder %s110, %s113
      %p119 = scmp.eq.s32.totalorder %s22, 0
      %p120 = por %p118, %p119
      %p121 = scmp.ne.s32.totalorder %s110, %s113
      %p122 = scmp.eq.s32.totalorder %s27, 1
      %p123 = por %p121, %p122
      %p124 = scmp.ne.s32.totalorder %s113, %s114
      %p125 = scmp.eq.s32.totalorder %s27, 0
      %p126 = por %p124, %p125
      %p127 = scmp.ne.s32.totalorder %s113, %s114
      %p128 = scmp.eq.s32.totalorder %s28, 1
      %p129 = por %p127, %p128
      %p131 = scmp.ne.s32.totalorder %s114, %s130
      %p132 = scmp.eq.s32.totalorder %s28, 0
      %p133 = por %p131, %p132
      %p134 = scmp.le.s32.totalorder 1, %s22
      %p135 = scmp.lt.s32.totalorder %s22, 3
      %p136 = pnand %p134, %p135
      %p137 = pneg %p136
      // Predicated region
      $region9: #{tpu_custom_call.1} parent=5 // pred_check
        _
      $region10: #{tpu_custom_call.1} parent=5 // pred_check_branch
        %139 = sbr.rel (%p136) target = $region12
      $region11: #{tpu_custom_call.1} parent=5 // pred_region
        %s140 = ssub.s32 %s22, 1
      $region12: #{tpu_custom_call.1} parent=5 // pred_fallthru
        _
      %p141 = scmp.lt.s32.totalorder %s22, 2
      // Predicated region
      $region13: #{tpu_custom_call.1} parent=5 // pred_check
        %p142 = pneg %p141
      $region14: #{tpu_custom_call.1} parent=5 // pred_check_branch
        %144 = sbr.rel (%p142) target = $region16
      $region15: #{tpu_custom_call.1} parent=5 // pred_region
        // Predicated region
        $region17: #{tpu_custom_call.1} parent=15 // pred_check
          %p145 = pneg %p42
        $region18: #{tpu_custom_call.1} parent=15 // pred_check_branch
          %147 = sbr.rel (%p145) target = $region20
        $region19: #{tpu_custom_call.1} parent=15 // pred_region
          %s148 = smul.u32 8, %s22
          %p149 = scmp.lt.s32.totalorder %s148, 15
          %s150 = scalar_select %p149, %s148, 15
          %s151 = smul.addr %s150, 8
          %s152 = scalar_lea.vmem %s1, %s151
          %s153 = smul.u32 8, %s22
        $region20: #{tpu_custom_call.1} parent=15 // pred_fallthru
          _
        // Predicated region
        $region21: #{tpu_custom_call.1} parent=15 // pred_check
          %p154 = pneg %p68
        $region22: #{tpu_custom_call.1} parent=15 // pred_check_branch
          %156 = sbr.rel (%p154) target = $region24
        $region23: #{tpu_custom_call.1} parent=15 // pred_region
          %s157 = sand.u32 %s58, 1
          %s158 = scalar_lea.sflag [#allocation7], %s157
          %s159 = sand.u32 %s58, 1
          %s160 = smul.addr %s159, 64
          %s161 = scalar_lea.vmem [#allocation6], %s160
          %s162 = smul.u32 8, %s22
          %164 = vsyncadd %s158, 0
          %s165 = smul.addr %s162, 8
          %s166 = scalar_lea.hbm %s2, %s165
          %s167 = sshll.u32 %s166, 4
          %s168 = int_to_ptr.hbm [resolvable:$true] %s167
          %s169 = sshll.u32 %s161, 4
          %s170 = int_to_ptr.vmem [resolvable:$true] %s169
          %175 = dma.hbm_to_vmem [thread:$0]  %s168, 1024, %s170, %s158, 128, 128, 8
        $region24: #{tpu_custom_call.1} parent=15 // pred_fallthru
          _
        // Predicated region
        $region25: #{tpu_custom_call.1} parent=15 // pred_check
          %p176 = pneg %p94
        $region26: #{tpu_custom_call.1} parent=15 // pred_check_branch
          %178 = sbr.rel (%p176) target = $region28
        $region27: #{tpu_custom_call.1} parent=15 // pred_region
          %s179 = smul.u32 8, %s22
          %p180 = scmp.lt.s32.totalorder %s179, 15
          %s181 = scalar_select %p180, %s179, 15
          %s182 = smul.addr %s181, 8
          %s183 = scalar_lea.vmem %s4, %s182
          %s184 = smul.u32 8, %s22
        $region28: #{tpu_custom_call.1} parent=15 // pred_fallthru
          _
      $region16: #{tpu_custom_call.1} parent=5 // pred_fallthru
        _
      %p185 = scmp.le.s32.totalorder 1, %s22
      %p186 = scmp.lt.s32.totalorder %s22, 3
      %p187 = pnand %p185, %p186
      %p188 = pneg %p187
      // Predicated region
      $region29: #{tpu_custom_call.1} parent=5 // pred_check
        _
      $region30: #{tpu_custom_call.1} parent=5 // pred_check_branch
        %190 = sbr.rel (%p187) target = $region32
      $region31: #{tpu_custom_call.1} parent=5 // pred_region
        %s191 = ssub.s32 %s22, 1
        %s192 = sand.u32 %s61, 1
        %s193 = scalar_lea.sflag [#allocation7], %s192
        %s194 = sand.u32 %s61, 1
        %s195 = smul.addr %s194, 64
        %s196 = scalar_lea.vmem [#allocation6], %s195
        // Predicated region
        $region33: #{tpu_custom_call.1} parent=31 // pred_check
          %p197 = pneg %p74
        $region34: #{tpu_custom_call.1} parent=31 // pred_check_branch
          %199 = sbr.rel (%p197) target = $region36
        $region35: #{tpu_custom_call.1} parent=31 // pred_region
          %201 = dma.done %s193, 1024
        $region36: #{tpu_custom_call.1} parent=31 // pred_fallthru
          _
        %s202 = smul.u32 8, %s27
        %p203 = scmp.lt.s32.totalorder %s202, 15
        %s204 = scalar_select %p203, %s202, 15
        %s205 = smul.addr %s204, 8
        %s206 = scalar_lea.vmem %s1, %s205
        %p207 = pneg %p48
        %p208 = pneg %p45
        %s209 = sand.u32 %s61, 1
        %s210 = scalar_lea.sflag [#allocation7], %s209
        %s211 = sand.u32 %s61, 1
        %s212 = smul.addr %s211, 64
        %s213 = scalar_lea.vmem [#allocation6], %s212
        %p214 = pneg %p74
        %p215 = pneg %p71
        %s216 = smul.u32 8, %s27
        %p217 = scmp.lt.s32.totalorder %s216, 15
        %s218 = scalar_select %p217, %s216, 15
        %s219 = smul.addr %s218, 8
        %s220 = scalar_lea.vmem %s4, %s219
        %p221 = pneg %p100
        %p222 = pneg %p97
        %p223 = pneg %p126
        %p224 = pneg %p123
        %p225 = scmp.lt.s32.totalorder %s27, 1
        %s226 = scalar_select %p225, %s27, 1
        %s227 = smul.addr %s226, 8
        %s228 = scalar_lea.vmem %s5, %s227
        %s229 = smul.u32 8, %s27
        %p230 = scmp.lt.s32.totalorder %s229, 15
        %s231 = scalar_select %p230, %s229, 15
        %s232 = smul.addr %s231, 8
        %s233 = scalar_lea.vmem %s1, %s232
        %s234 = smul.u32 8, %s27
        %s235 = smul.u32 8, %s27
        %s236 = smul.u32 8, %s27
        %p237 = scmp.lt.s32.totalorder %s236, 15
        %s238 = scalar_select %p237, %s236, 15
        %s239 = smul.addr %s238, 8
        %s240 = scalar_lea.vmem %s4, %s239
        %s241 = smul.u32 8, %s27
        %p242 = scmp.lt.s32.totalorder %s27, 1
        %s243 = scalar_select %p242, %s27, 1
        %s244 = smul.addr %s243, 8
        %s245 = scalar_lea.vmem %s5, %s244
        %s247 = smul.u32 %s27, 8
        %s248 = sld [smem:[#allocation5 + %s247]]
        %s249 = smul.u32 %s248, 32
        %s250 = scalar_lea.hbm %s3, %s249
        // Predicated region
        $region37: #{tpu_custom_call.1} parent=31 // pred_check
          _
        $region38: #{tpu_custom_call.1} parent=31 // pred_check_branch
          %252 = sbr.rel target = $region40
        $region39: #{tpu_custom_call.1} parent=31 // pred_region
          %253 = sst [smem:[#allocation10]] [#allocation9]
          %254 = sst [smem:[#allocation11]] [#allocation8]
        $region40: #{tpu_custom_call.1} parent=31 // pred_fallthru
          _
        %256 = shalt.err (0)
        %s258 = sshll.u32 %s250, 4
        %s259 = int_to_ptr.hbm [resolvable:$true] %s258
        %s260 = sshll.u32 [#allocation2], 4
        %s261 = int_to_ptr.vmem [resolvable:$true] %s260
        %263 = dma.hbm_to_vmem [thread:$0]  %s259, 512, %s261, [#allocation3]
        %s264 = sadd.s32 %s247, 1
        %s265 = sld [smem:[#allocation5 + %s264]]
        %s266 = smul.u32 %s265, 32
        %s267 = scalar_lea.hbm %s3, %s266
        %s268 = scalar_lea.vmem [#allocation2], 32
        %s269 = scalar_lea.sflag [#allocation3], 1
        // Predicated region
        $region41: #{tpu_custom_call.1} parent=31 // pred_check
          _
        $region42: #{tpu_custom_call.1} parent=31 // pred_check_branch
          %271 = sbr.rel target = $region44
        $region43: #{tpu_custom_call.1} parent=31 // pred_region
          %272 = sst [smem:[#allocation10]] [#allocation13]
          %273 = sst [smem:[#allocation11]] [#allocation12]
        $region44: #{tpu_custom_call.1} parent=31 // pred_fallthru
          _
        %275 = shalt.err (0)
        %s277 = sshll.u32 %s267, 4
        %s278 = int_to_ptr.hbm [resolvable:$true] %s277
        %s279 = sshll.u32 %s268, 4
        %s280 = int_to_ptr.vmem [resolvable:$true] %s279
        %282 = dma.hbm_to_vmem [thread:$0]  %s278, 512, %s280, %s269
        %s283 = sadd.s32 %s247, 2
        %s284 = sld [smem:[#allocation5 + %s283]]
        %s285 = smul.u32 %s284, 32
        %s286 = scalar_lea.hbm %s3, %s285
        %s287 = scalar_lea.vmem [#allocation2], 64
        %s288 = scalar_lea.sflag [#allocation3], 2
        // Predicated region
        $region45: #{tpu_custom_call.1} parent=31 // pred_check
          _
        $region46: #{tpu_custom_call.1} parent=31 // pred_check_branch
          %290 = sbr.rel target = $region48
        $region47: #{tpu_custom_call.1} parent=31 // pred_region
          %291 = sst [smem:[#allocation10]] [#allocation15]
          %292 = sst [smem:[#allocation11]] [#allocation14]
        $region48: #{tpu_custom_call.1} parent=31 // pred_fallthru
          _
        %294 = shalt.err (0)
        %s296 = sshll.u32 %s286, 4
        %s297 = int_to_ptr.hbm [resolvable:$true] %s296
        %s298 = sshll.u32 %s287, 4
        %s299 = int_to_ptr.vmem [resolvable:$true] %s298
        %301 = dma.hbm_to_vmem [thread:$0]  %s297, 512, %s299, %s288
        %s302 = sadd.s32 %s247, 3
        %s303 = sld [smem:[#allocation5 + %s302]]
        %s304 = smul.u32 %s303, 32
        %s305 = scalar_lea.hbm %s3, %s304
        %s306 = scalar_lea.vmem [#allocation2], 96
        %s307 = scalar_lea.sflag [#allocation3], 3
        // Predicated region
        $region49: #{tpu_custom_call.1} parent=31 // pred_check
          _
        $region50: #{tpu_custom_call.1} parent=31 // pred_check_branch
          %309 = sbr.rel target = $region52
        $region51: #{tpu_custom_call.1} parent=31 // pred_region
          %310 = sst [smem:[#allocation10]] [#allocation17]
          %311 = sst [smem:[#allocation11]] [#allocation16]
        $region52: #{tpu_custom_call.1} parent=31 // pred_fallthru
          _
        %313 = shalt.err (0)
        %s315 = sshll.u32 %s305, 4
        %s316 = int_to_ptr.hbm [resolvable:$true] %s315
        %s317 = sshll.u32 %s306, 4
        %s318 = int_to_ptr.vmem [resolvable:$true] %s317
        %320 = dma.hbm_to_vmem [thread:$0]  %s316, 512, %s318, %s307
        %s321 = sadd.s32 %s247, 4
        %s322 = sld [smem:[#allocation5 + %s321]]
        %s323 = smul.u32 %s322, 32
        %s324 = scalar_lea.hbm %s3, %s323
        %s325 = scalar_lea.vmem [#allocation2], 128
        %s326 = scalar_lea.sflag [#allocation3], 4
        // Predicated region
        $region53: #{tpu_custom_call.1} parent=31 // pred_check
          _
        $region54: #{tpu_custom_call.1} parent=31 // pred_check_branch
          %328 = sbr.rel target = $region56
        $region55: #{tpu_custom_call.1} parent=31 // pred_region
          %329 = sst [smem:[#allocation10]] [#allocation19]
          %330 = sst [smem:[#allocation11]] [#allocation18]
        $region56: #{tpu_custom_call.1} parent=31 // pred_fallthru
          _
        %332 = shalt.err (0)
        %s334 = sshll.u32 %s324, 4
        %s335 = int_to_ptr.hbm [resolvable:$true] %s334
        %s336 = sshll.u32 %s325, 4
        %s337 = int_to_ptr.vmem [resolvable:$true] %s336
        %339 = dma.hbm_to_vmem [thread:$0]  %s335, 512, %s337, %s326
        %s340 = sadd.s32 %s247, 5
        %s341 = sld [smem:[#allocation5 + %s340]]
        %s342 = smul.u32 %s341, 32
        %s343 = scalar_lea.hbm %s3, %s342
        %s344 = scalar_lea.vmem [#allocation2], 160
        %s345 = scalar_lea.sflag [#allocation3], 5
        // Predicated region
        $region57: #{tpu_custom_call.1} parent=31 // pred_check
          _
        $region58: #{tpu_custom_call.1} parent=31 // pred_check_branch
          %347 = sbr.rel target = $region60
        $region59: #{tpu_custom_call.1} parent=31 // pred_region
          %348 = sst [smem:[#allocation10]] [#allocation21]
          %349 = sst [smem:[#allocation11]] [#allocation20]
        $region60: #{tpu_custom_call.1} parent=31 // pred_fallthru
          _
        %351 = shalt.err (0)
        %s353 = sshll.u32 %s343, 4
        %s354 = int_to_ptr.hbm [resolvable:$true] %s353
        %s355 = sshll.u32 %s344, 4
        %s356 = int_to_ptr.vmem [resolvable:$true] %s355
        %358 = dma.hbm_to_vmem [thread:$0]  %s354, 512, %s356, %s345
        %s359 = sadd.s32 %s247, 6
        %s360 = sld [smem:[#allocation5 + %s359]]
        %s361 = smul.u32 %s360, 32
        %s362 = scalar_lea.hbm %s3, %s361
        %s363 = scalar_lea.vmem [#allocation2], 192
        %s364 = scalar_lea.sflag [#allocation3], 6
        // Predicated region
        $region61: #{tpu_custom_call.1} parent=31 // pred_check
          _
        $region62: #{tpu_custom_call.1} parent=31 // pred_check_branch
          %366 = sbr.rel target = $region64
        $region63: #{tpu_custom_call.1} parent=31 // pred_region
          %367 = sst [smem:[#allocation10]] [#allocation23]
          %368 = sst [smem:[#allocation11]] [#allocation22]
        $region64: #{tpu_custom_call.1} parent=31 // pred_fallthru
          _
        %370 = shalt.err (0)
        %s372 = sshll.u32 %s362, 4
        %s373 = int_to_ptr.hbm [resolvable:$true] %s372
        %s374 = sshll.u32 %s363, 4
        %s375 = int_to_ptr.vmem [resolvable:$true] %s374
        %377 = dma.hbm_to_vmem [thread:$0]  %s373, 512, %s375, %s364
        %s378 = sadd.s32 %s247, 7
        %s379 = sld [smem:[#allocation5 + %s378]]
        %s380 = smul.u32 %s379, 32
        %s381 = scalar_lea.hbm %s3, %s380
        %s382 = scalar_lea.vmem [#allocation2], 224
        %s383 = scalar_lea.sflag [#allocation3], 7
        // Predicated region
        $region65: #{tpu_custom_call.1} parent=31 // pred_check
          _
        $region66: #{tpu_custom_call.1} parent=31 // pred_check_branch
          %385 = sbr.rel target = $region68
        $region67: #{tpu_custom_call.1} parent=31 // pred_region
          %386 = sst [smem:[#allocation10]] [#allocation25]
          %387 = sst [smem:[#allocation11]] [#allocation24]
        $region68: #{tpu_custom_call.1} parent=31 // pred_fallthru
          _
        %389 = shalt.err (0)
        %s391 = sshll.u32 %s381, 4
        %s392 = int_to_ptr.hbm [resolvable:$true] %s391
        %s393 = sshll.u32 %s382, 4
        %s394 = int_to_ptr.vmem [resolvable:$true] %s393
        %396 = dma.hbm_to_vmem [thread:$0]  %s392, 512, %s394, %s383
        %v397 = vld [vmem:[%s233] sm:$0xff]
        %v398 = vld [vmem:[%s233 + $0x8] sm:$0xff]
        %v399 = vld [vmem:[%s233 + $0x10] sm:$0xff]
        %v400 = vld [vmem:[%s233 + $0x18] sm:$0xff]
        %v401 = vld [vmem:[%s233 + $0x20] sm:$0xff]
        %v402 = vld [vmem:[%s233 + $0x28] sm:$0xff]
        %v403 = vld [vmem:[%s233 + $0x30] sm:$0xff]
        %v404 = vld [vmem:[%s233 + $0x38] sm:$0xff]
        %v405 = vld [vmem:[%s196] sm:$0xff]
        %v406 = vld [vmem:[%s196 + $0x8] sm:$0xff]
        %v407 = vld [vmem:[%s196 + $0x10] sm:$0xff]
        %v408 = vld [vmem:[%s196 + $0x18] sm:$0xff]
        %v409 = vld [vmem:[%s196 + $0x20] sm:$0xff]
        %v410 = vld [vmem:[%s196 + $0x28] sm:$0xff]
        %v411 = vld [vmem:[%s196 + $0x30] sm:$0xff]
        %v412 = vld [vmem:[%s196 + $0x38] sm:$0xff]
        %v413 = vmul.f32 %v397, %v397
        %v414 = vmul.f32 %v398, %v398
        %v415 = vmul.f32 %v399, %v399
        %v416 = vmul.f32 %v400, %v400
        %v417 = vmul.f32 %v401, %v401
        %v418 = vmul.f32 %v402, %v402
        %v419 = vmul.f32 %v403, %v403
        %v420 = vmul.f32 %v404, %v404
        %vm421 = vcmask 261120
        %v422 = vsel %vm421, %v413, 0.0
        %423 = vadd.xlane.f32.xlu0 %v422
        %v424 = vpop.xlane.xlu0 %423
        %v425 = vsel %vm421, %v414, 0.0
        %426 = vadd.xlane.f32.xlu0 %v425
        %v427 = vpop.xlane.xlu0 %426
        %v428 = vsel %vm421, %v415, 0.0
        %429 = vadd.xlane.f32.xlu0 %v428
        %v430 = vpop.xlane.xlu0 %429
        %v431 = vsel %vm421, %v416, 0.0
        %432 = vadd.xlane.f32.xlu0 %v431
        %v433 = vpop.xlane.xlu0 %432
        %v434 = vsel %vm421, %v417, 0.0
        %435 = vadd.xlane.f32.xlu0 %v434
        %v436 = vpop.xlane.xlu0 %435
        %v437 = vsel %vm421, %v418, 0.0
        %438 = vadd.xlane.f32.xlu0 %v437
        %v439 = vpop.xlane.xlu0 %438
        %v440 = vsel %vm421, %v419, 0.0
        %441 = vadd.xlane.f32.xlu0 %v440
        %v442 = vpop.xlane.xlu0 %441
        %v443 = vsel %vm421, %v420, 0.0
        %444 = vadd.xlane.f32.xlu0 %v443
        %v445 = vpop.xlane.xlu0 %444
        %v446 = vrsqrt.pop %v424
        %v447 = vmul.f32 %v446, %v424
        %v448 = vmul.f32 %v447, %v446
        %v449 = vmul.f32 0.5, %v448
        %v450 = vsub.f32 1.5, %v449
        %v451 = vmul.f32 %v446, %v450
        %v452 = vmul.f32 %v424, %v451
        %vm453 = vcmp.eq.f32.partialorder %v424, inf
        %v454 = vsel %vm453, %v424, %v452
        %vm455 = vcmp.eq.f32.partialorder %v424, 0.0
        %v456 = vand.u32 %v424, 2147483648
        %v457 = vsel %vm455, %v456, %v454
        %v458 = vrsqrt.pop %v427
        %v459 = vmul.f32 %v458, %v427
        %v460 = vmul.f32 %v459, %v458
        %v461 = vmul.f32 0.5, %v460
        %v462 = vsub.f32 1.5, %v461
        %v463 = vmul.f32 %v458, %v462
        %v464 = vmul.f32 %v427, %v463
        %vm465 = vcmp.eq.f32.partialorder %v427, inf
        %v466 = vsel %vm465, %v427, %v464
        %vm467 = vcmp.eq.f32.partialorder %v427, 0.0
        %v468 = vand.u32 %v427, 2147483648
        %v469 = vsel %vm467, %v468, %v466
        %v470 = vrsqrt.pop %v430
        %v471 = vmul.f32 %v470, %v430
        %v472 = vmul.f32 %v471, %v470
        %v473 = vmul.f32 0.5, %v472
        %v474 = vsub.f32 1.5, %v473
        %v475 = vmul.f32 %v470, %v474
        %v476 = vmul.f32 %v430, %v475
        %vm477 = vcmp.eq.f32.partialorder %v430, inf
        %v478 = vsel %vm477, %v430, %v476
        %vm479 = vcmp.eq.f32.partialorder %v430, 0.0
        %v480 = vand.u32 %v430, 2147483648
        %v481 = vsel %vm479, %v480, %v478
        %v482 = vrsqrt.pop %v433
        %v483 = vmul.f32 %v482, %v433
        %v484 = vmul.f32 %v483, %v482
        %v485 = vmul.f32 0.5, %v484
        %v486 = vsub.f32 1.5, %v485
        %v487 = vmul.f32 %v482, %v486
        %v488 = vmul.f32 %v433, %v487
        %vm489 = vcmp.eq.f32.partialorder %v433, inf
        %v490 = vsel %vm489, %v433, %v488
        %vm491 = vcmp.eq.f32.partialorder %v433, 0.0
        %v492 = vand.u32 %v433, 2147483648
        %v493 = vsel %vm491, %v492, %v490
        %v494 = vrsqrt.pop %v436
        %v495 = vmul.f32 %v494, %v436
        %v496 = vmul.f32 %v495, %v494
        %v497 = vmul.f32 0.5, %v496
        %v498 = vsub.f32 1.5, %v497
        %v499 = vmul.f32 %v494, %v498
        %v500 = vmul.f32 %v436, %v499
        %vm501 = vcmp.eq.f32.partialorder %v436, inf
        %v502 = vsel %vm501, %v436, %v500
        %vm503 = vcmp.eq.f32.partialorder %v436, 0.0
        %v504 = vand.u32 %v436, 2147483648
        %v505 = vsel %vm503, %v504, %v502
        %v506 = vrsqrt.pop %v439
        %v507 = vmul.f32 %v506, %v439
        %v508 = vmul.f32 %v507, %v506
        %v509 = vmul.f32 0.5, %v508
        %v510 = vsub.f32 1.5, %v509
        %v511 = vmul.f32 %v506, %v510
        %v512 = vmul.f32 %v439, %v511
        %vm513 = vcmp.eq.f32.partialorder %v439, inf
        %v514 = vsel %vm513, %v439, %v512
        %vm515 = vcmp.eq.f32.partialorder %v439, 0.0
        %v516 = vand.u32 %v439, 2147483648
        %v517 = vsel %vm515, %v516, %v514
        %v518 = vrsqrt.pop %v442
        %v519 = vmul.f32 %v518, %v442
        %v520 = vmul.f32 %v519, %v518
        %v521 = vmul.f32 0.5, %v520
        %v522 = vsub.f32 1.5, %v521
        %v523 = vmul.f32 %v518, %v522
        %v524 = vmul.f32 %v442, %v523
        %vm525 = vcmp.eq.f32.partialorder %v442, inf
        %v526 = vsel %vm525, %v442, %v524
        %vm527 = vcmp.eq.f32.partialorder %v442, 0.0
        %v528 = vand.u32 %v442, 2147483648
        %v529 = vsel %vm527, %v528, %v526
        %v530 = vrsqrt.pop %v445
        %v531 = vmul.f32 %v530, %v445
        %v532 = vmul.f32 %v531, %v530
        %v533 = vmul.f32 0.5, %v532
        %v534 = vsub.f32 1.5, %v533
        %v535 = vmul.f32 %v530, %v534
        %v536 = vmul.f32 %v445, %v535
        %vm537 = vcmp.eq.f32.partialorder %v445, inf
        %v538 = vsel %vm537, %v445, %v536
        %vm539 = vcmp.eq.f32.partialorder %v445, 0.0
        %v540 = vand.u32 %v445, 2147483648
        %v541 = vsel %vm539, %v540, %v538
        %v542 = vmul.f32 %v405, %v405
        %v543 = vmul.f32 %v406, %v406
        %v544 = vmul.f32 %v407, %v407
        %v545 = vmul.f32 %v408, %v408
        %v546 = vmul.f32 %v409, %v409
        %v547 = vmul.f32 %v410, %v410
        %v548 = vmul.f32 %v411, %v411
        %v549 = vmul.f32 %v412, %v412
        %v550 = vsel %vm421, %v542, 0.0
        %551 = vadd.xlane.f32.xlu0 %v550
        %v552 = vpop.xlane.xlu0 %551
        %v553 = vsel %vm421, %v543, 0.0
        %554 = vadd.xlane.f32.xlu0 %v553
        %v555 = vpop.xlane.xlu0 %554
        %v556 = vsel %vm421, %v544, 0.0
        %557 = vadd.xlane.f32.xlu0 %v556
        %v558 = vpop.xlane.xlu0 %557
        %v559 = vsel %vm421, %v545, 0.0
        %560 = vadd.xlane.f32.xlu0 %v559
        %v561 = vpop.xlane.xlu0 %560
        %v562 = vsel %vm421, %v546, 0.0
        %563 = vadd.xlane.f32.xlu0 %v562
        %v564 = vpop.xlane.xlu0 %563
        %v565 = vsel %vm421, %v547, 0.0
        %566 = vadd.xlane.f32.xlu0 %v565
        %v567 = vpop.xlane.xlu0 %566
        %v568 = vsel %vm421, %v548, 0.0
        %569 = vadd.xlane.f32.xlu0 %v568
        %v570 = vpop.xlane.xlu0 %569
        %v571 = vsel %vm421, %v549, 0.0
        %572 = vadd.xlane.f32.xlu0 %v571
        %v573 = vpop.xlane.xlu0 %572
        %v574 = vrsqrt.pop %v552
        %v575 = vmul.f32 %v574, %v552
        %v576 = vmul.f32 %v575, %v574
        %v577 = vmul.f32 0.5, %v576
        %v578 = vsub.f32 1.5, %v577
        %v579 = vmul.f32 %v574, %v578
        %v580 = vmul.f32 %v552, %v579
        %vm581 = vcmp.eq.f32.partialorder %v552, inf
        %v582 = vsel %vm581, %v552, %v580
        %vm583 = vcmp.eq.f32.partialorder %v552, 0.0
        %v584 = vand.u32 %v552, 2147483648
        %v585 = vsel %vm583, %v584, %v582
        %v586 = vrsqrt.pop %v555
        %v587 = vmul.f32 %v586, %v555
        %v588 = vmul.f32 %v587, %v586
        %v589 = vmul.f32 0.5, %v588
        %v590 = vsub.f32 1.5, %v589
        %v591 = vmul.f32 %v586, %v590
        %v592 = vmul.f32 %v555, %v591
        %vm593 = vcmp.eq.f32.partialorder %v555, inf
        %v594 = vsel %vm593, %v555, %v592
        %vm595 = vcmp.eq.f32.partialorder %v555, 0.0
        %v596 = vand.u32 %v555, 2147483648
        %v597 = vsel %vm595, %v596, %v594
        %v598 = vrsqrt.pop %v558
        %v599 = vmul.f32 %v598, %v558
        %v600 = vmul.f32 %v599, %v598
        %v601 = vmul.f32 0.5, %v600
        %v602 = vsub.f32 1.5, %v601
        %v603 = vmul.f32 %v598, %v602
        %v604 = vmul.f32 %v558, %v603
        %vm605 = vcmp.eq.f32.partialorder %v558, inf
        %v606 = vsel %vm605, %v558, %v604
        %vm607 = vcmp.eq.f32.partialorder %v558, 0.0
        %v608 = vand.u32 %v558, 2147483648
        %v609 = vsel %vm607, %v608, %v606
        %v610 = vrsqrt.pop %v561
        %v611 = vmul.f32 %v610, %v561
        %v612 = vmul.f32 %v611, %v610
        %v613 = vmul.f32 0.5, %v612
        %v614 = vsub.f32 1.5, %v613
        %v615 = vmul.f32 %v610, %v614
        %v616 = vmul.f32 %v561, %v615
        %vm617 = vcmp.eq.f32.partialorder %v561, inf
        %v618 = vsel %vm617, %v561, %v616
        %vm619 = vcmp.eq.f32.partialorder %v561, 0.0
        %v620 = vand.u32 %v561, 2147483648
        %v621 = vsel %vm619, %v620, %v618
        %v622 = vrsqrt.pop %v564
        %v623 = vmul.f32 %v622, %v564
        %v624 = vmul.f32 %v623, %v622
        %v625 = vmul.f32 0.5, %v624
        %v626 = vsub.f32 1.5, %v625
        %v627 = vmul.f32 %v622, %v626
        %v628 = vmul.f32 %v564, %v627
        %vm629 = vcmp.eq.f32.partialorder %v564, inf
        %v630 = vsel %vm629, %v564, %v628
        %vm631 = vcmp.eq.f32.partialorder %v564, 0.0
        %v632 = vand.u32 %v564, 2147483648
        %v633 = vsel %vm631, %v632, %v630
        %v634 = vrsqrt.pop %v567
        %v635 = vmul.f32 %v634, %v567
        %v636 = vmul.f32 %v635, %v634
        %v637 = vmul.f32 0.5, %v636
        %v638 = vsub.f32 1.5, %v637
        %v639 = vmul.f32 %v634, %v638
        %v640 = vmul.f32 %v567, %v639
        %vm641 = vcmp.eq.f32.partialorder %v567, inf
        %v642 = vsel %vm641, %v567, %v640
        %vm643 = vcmp.eq.f32.partialorder %v567, 0.0
        %v644 = vand.u32 %v567, 2147483648
        %v645 = vsel %vm643, %v644, %v642
        %v646 = vrsqrt.pop %v570
        %v647 = vmul.f32 %v646, %v570
        %v648 = vmul.f32 %v647, %v646
        %v649 = vmul.f32 0.5, %v648
        %v650 = vsub.f32 1.5, %v649
        %v651 = vmul.f32 %v646, %v650
        %v652 = vmul.f32 %v570, %v651
        %vm653 = vcmp.eq.f32.partialorder %v570, inf
        %v654 = vsel %vm653, %v570, %v652
        %vm655 = vcmp.eq.f32.partialorder %v570, 0.0
        %v656 = vand.u32 %v570, 2147483648
        %v657 = vsel %vm655, %v656, %v654
        %v658 = vrsqrt.pop %v573
        %v659 = vmul.f32 %v658, %v573
        %v660 = vmul.f32 %v659, %v658
        %v661 = vmul.f32 0.5, %v660
        %v662 = vsub.f32 1.5, %v661
        %v663 = vmul.f32 %v658, %v662
        %v664 = vmul.f32 %v573, %v663
        %vm665 = vcmp.eq.f32.partialorder %v573, inf
        %v666 = vsel %vm665, %v573, %v664
        %vm667 = vcmp.eq.f32.partialorder %v573, 0.0
        %v668 = vand.u32 %v573, 2147483648
        %v669 = vsel %vm667, %v668, %v666
        %v670 = vmax.f32 %v457, 1e-12
        %v671 = vmax.f32 %v469, 1e-12
        %v672 = vmax.f32 %v481, 1e-12
        %v673 = vmax.f32 %v493, 1e-12
        %v674 = vmax.f32 %v505, 1e-12
        %v675 = vmax.f32 %v517, 1e-12
        %v676 = vmax.f32 %v529, 1e-12
        %v677 = vmax.f32 %v541, 1e-12
        %v678 = vrcp.pop %v670
        %v679 = vrcp.pop %v671
        %v680 = vrcp.pop %v672
        %v681 = vrcp.pop %v673
        %v682 = vrcp.pop %v674
        %v683 = vrcp.pop %v675
        %v684 = vrcp.pop %v676
        %v685 = vrcp.pop %v677
        %v686 = vmax.f32 %v585, 1e-12
        %v687 = vmax.f32 %v597, 1e-12
        %v688 = vmax.f32 %v609, 1e-12
        %v689 = vmax.f32 %v621, 1e-12
        %v690 = vmax.f32 %v633, 1e-12
        %v691 = vmax.f32 %v645, 1e-12
        %v692 = vmax.f32 %v657, 1e-12
        %v693 = vmax.f32 %v669, 1e-12
        %v694 = vrcp.pop %v686
        %v695 = vrcp.pop %v687
        %v696 = vrcp.pop %v688
        %v697 = vrcp.pop %v689
        %v698 = vrcp.pop %v690
        %v699 = vrcp.pop %v691
        %v700 = vrcp.pop %v692
        %v701 = vrcp.pop %v693
        %s702 = smul.u32 32, 1
        %s703 = sshll.u32 %s702, 4
        %704 = dma.done [#allocation3], %s703
        %s705 = sshll.u32 %s702, 4
        %706 = dma.done %s269, %s705
        %s707 = sshll.u32 %s702, 4
        %708 = dma.done %s288, %s707
        %s709 = sshll.u32 %s702, 4
        %710 = dma.done %s307, %s709
        %s711 = sshll.u32 %s702, 4
        %712 = dma.done %s326, %s711
        %s713 = sshll.u32 %s702, 4
        %714 = dma.done %s345, %s713
        %s715 = sshll.u32 %s702, 4
        %716 = dma.done %s364, %s715
        %s717 = sshll.u32 %s702, 4
        %718 = dma.done %s383, %s717
        %v719 = vld [vmem:[#allocation2] sm:$0xff]
        %v720 = vld [vmem:[#allocation2 + $0x8] sm:$0xff]
        %v721 = vld [vmem:[#allocation2 + $0x10] sm:$0xff]
        %v722 = vld [vmem:[#allocation2 + $0x18] sm:$0xff]
        %v723 = vld [vmem:[#allocation2 + $0x20] sm:$0xff]
        %v724 = vld [vmem:[#allocation2 + $0x28] sm:$0xff]
        %v725 = vld [vmem:[#allocation2 + $0x30] sm:$0xff]
        %v726 = vld [vmem:[#allocation2 + $0x38] sm:$0xff]
        %v727 = vld [vmem:[#allocation2 + $0x40] sm:$0xff]
        %v728 = vld [vmem:[#allocation2 + $0x48] sm:$0xff]
        %v729 = vld [vmem:[#allocation2 + $0x50] sm:$0xff]
        %v730 = vld [vmem:[#allocation2 + $0x58] sm:$0xff]
        %v731 = vld [vmem:[#allocation2 + $0x60] sm:$0xff]
        %v732 = vld [vmem:[#allocation2 + $0x68] sm:$0xff]
        %v733 = vld [vmem:[#allocation2 + $0x70] sm:$0xff]
        %v734 = vld [vmem:[#allocation2 + $0x78] sm:$0xff]
        %v735 = vld [vmem:[#allocation2 + $0x80] sm:$0xff]
        %v736 = vld [vmem:[#allocation2 + $0x88] sm:$0xff]
        %v737 = vld [vmem:[#allocation2 + $0x90] sm:$0xff]
        %v738 = vld [vmem:[#allocation2 + $0x98] sm:$0xff]
        %v739 = vld [vmem:[#allocation2 + $0xa0] sm:$0xff]
        %v740 = vld [vmem:[#allocation2 + $0xa8] sm:$0xff]
        %v741 = vld [vmem:[#allocation2 + $0xb0] sm:$0xff]
        %v742 = vld [vmem:[#allocation2 + $0xb8] sm:$0xff]
        %v743 = vld [vmem:[#allocation2 + $0xc0] sm:$0xff]
        %v744 = vld [vmem:[#allocation2 + $0xc8] sm:$0xff]
        %v745 = vld [vmem:[#allocation2 + $0xd0] sm:$0xff]
        %v746 = vld [vmem:[#allocation2 + $0xd8] sm:$0xff]
        %v747 = vld [vmem:[#allocation2 + $0xe0] sm:$0xff]
        %v748 = vld [vmem:[#allocation2 + $0xe8] sm:$0xff]
        %v749 = vld [vmem:[#allocation2 + $0xf0] sm:$0xff]
        %v750 = vld [vmem:[#allocation2 + $0xf8] sm:$0xff]
        %v751 = vmul.f32 %v719, %v719
        %v752 = vmul.f32 %v720, %v720
        %v753 = vmul.f32 %v721, %v721
        %v754 = vmul.f32 %v722, %v722
        %v755 = vmul.f32 %v723, %v723
        %v756 = vmul.f32 %v724, %v724
        %v757 = vmul.f32 %v725, %v725
        %v758 = vmul.f32 %v726, %v726
        %v759 = vmul.f32 %v727, %v727
        %v760 = vmul.f32 %v728, %v728
        %v761 = vmul.f32 %v729, %v729
        %v762 = vmul.f32 %v730, %v730
        %v763 = vmul.f32 %v731, %v731
        %v764 = vmul.f32 %v732, %v732
        %v765 = vmul.f32 %v733, %v733
        %v766 = vmul.f32 %v734, %v734
        %v767 = vmul.f32 %v735, %v735
        %v768 = vmul.f32 %v736, %v736
        %v769 = vmul.f32 %v737, %v737
        %v770 = vmul.f32 %v738, %v738
        %v771 = vmul.f32 %v739, %v739
        %v772 = vmul.f32 %v740, %v740
        %v773 = vmul.f32 %v741, %v741
        %v774 = vmul.f32 %v742, %v742
        %v775 = vmul.f32 %v743, %v743
        %v776 = vmul.f32 %v744, %v744
        %v777 = vmul.f32 %v745, %v745
        %v778 = vmul.f32 %v746, %v746
        %v779 = vmul.f32 %v747, %v747
        %v780 = vmul.f32 %v748, %v748
        %v781 = vmul.f32 %v749, %v749
        %v782 = vmul.f32 %v750, %v750
        %v783 = vsel %vm421, %v751, 0.0
        %784 = vadd.xlane.f32.xlu0 %v783
        %v785 = vpop.xlane.xlu0 %784
        %v786 = vsel %vm421, %v752, 0.0
        %787 = vadd.xlane.f32.xlu0 %v786
        %v788 = vpop.xlane.xlu0 %787
        %v789 = vsel %vm421, %v753, 0.0
        %790 = vadd.xlane.f32.xlu0 %v789
        %v791 = vpop.xlane.xlu0 %790
        %v792 = vsel %vm421, %v754, 0.0
        %793 = vadd.xlane.f32.xlu0 %v792
        %v794 = vpop.xlane.xlu0 %793
        %v795 = vsel %vm421, %v755, 0.0
        %796 = vadd.xlane.f32.xlu0 %v795
        %v797 = vpop.xlane.xlu0 %796
        %v798 = vsel %vm421, %v756, 0.0
        %799 = vadd.xlane.f32.xlu0 %v798
        %v800 = vpop.xlane.xlu0 %799
        %v801 = vsel %vm421, %v757, 0.0
        %802 = vadd.xlane.f32.xlu0 %v801
        %v803 = vpop.xlane.xlu0 %802
        %v804 = vsel %vm421, %v758, 0.0
        %805 = vadd.xlane.f32.xlu0 %v804
        %v806 = vpop.xlane.xlu0 %805
        %v807 = vsel %vm421, %v759, 0.0
        %808 = vadd.xlane.f32.xlu0 %v807
        %v809 = vpop.xlane.xlu0 %808
        %v810 = vsel %vm421, %v760, 0.0
        %811 = vadd.xlane.f32.xlu0 %v810
        %v812 = vpop.xlane.xlu0 %811
        %v813 = vsel %vm421, %v761, 0.0
        %814 = vadd.xlane.f32.xlu0 %v813
        %v815 = vpop.xlane.xlu0 %814
        %v816 = vsel %vm421, %v762, 0.0
        %817 = vadd.xlane.f32.xlu0 %v816
        %v818 = vpop.xlane.xlu0 %817
        %v819 = vsel %vm421, %v763, 0.0
        %820 = vadd.xlane.f32.xlu0 %v819
        %v821 = vpop.xlane.xlu0 %820
        %v822 = vsel %vm421, %v764, 0.0
        %823 = vadd.xlane.f32.xlu0 %v822
        %v824 = vpop.xlane.xlu0 %823
        %v825 = vsel %vm421, %v765, 0.0
        %826 = vadd.xlane.f32.xlu0 %v825
        %v827 = vpop.xlane.xlu0 %826
        %v828 = vsel %vm421, %v766, 0.0
        %829 = vadd.xlane.f32.xlu0 %v828
        %v830 = vpop.xlane.xlu0 %829
        %v831 = vsel %vm421, %v767, 0.0
        %832 = vadd.xlane.f32.xlu0 %v831
        %v833 = vpop.xlane.xlu0 %832
        %v834 = vsel %vm421, %v768, 0.0
        %835 = vadd.xlane.f32.xlu0 %v834
        %v836 = vpop.xlane.xlu0 %835
        %v837 = vsel %vm421, %v769, 0.0
        %838 = vadd.xlane.f32.xlu0 %v837
        %v839 = vpop.xlane.xlu0 %838
        %v840 = vsel %vm421, %v770, 0.0
        %841 = vadd.xlane.f32.xlu0 %v840
        %v842 = vpop.xlane.xlu0 %841
        %v843 = vsel %vm421, %v771, 0.0
        %844 = vadd.xlane.f32.xlu0 %v843
        %v845 = vpop.xlane.xlu0 %844
        %v846 = vsel %vm421, %v772, 0.0
        %847 = vadd.xlane.f32.xlu0 %v846
        %v848 = vpop.xlane.xlu0 %847
        %v849 = vsel %vm421, %v773, 0.0
        %850 = vadd.xlane.f32.xlu0 %v849
        %v851 = vpop.xlane.xlu0 %850
        %v852 = vsel %vm421, %v774, 0.0
        %853 = vadd.xlane.f32.xlu0 %v852
        %v854 = vpop.xlane.xlu0 %853
        %v855 = vsel %vm421, %v775, 0.0
        %856 = vadd.xlane.f32.xlu0 %v855
        %v857 = vpop.xlane.xlu0 %856
        %v858 = vsel %vm421, %v776, 0.0
        %859 = vadd.xlane.f32.xlu0 %v858
        %v860 = vpop.xlane.xlu0 %859
        %v861 = vsel %vm421, %v777, 0.0
        %862 = vadd.xlane.f32.xlu0 %v861
        %v863 = vpop.xlane.xlu0 %862
        %v864 = vsel %vm421, %v778, 0.0
        %865 = vadd.xlane.f32.xlu0 %v864
        %v866 = vpop.xlane.xlu0 %865
        %v867 = vsel %vm421, %v779, 0.0
        %868 = vadd.xlane.f32.xlu0 %v867
        %v869 = vpop.xlane.xlu0 %868
        %v870 = vsel %vm421, %v780, 0.0
        %871 = vadd.xlane.f32.xlu0 %v870
        %v872 = vpop.xlane.xlu0 %871
        %v873 = vsel %vm421, %v781, 0.0
        %874 = vadd.xlane.f32.xlu0 %v873
        %v875 = vpop.xlane.xlu0 %874
        %v876 = vsel %vm421, %v782, 0.0
        %877 = vadd.xlane.f32.xlu0 %v876
        %v878 = vpop.xlane.xlu0 %877
        %v911 = vlaneseq
        %v912 = vand.u32 %v911, 127
        %v913 = vperm.slane %v785, %v912
        %v914 = vadd.s32 %v912, 4294967288
        %v915 = vperm.slane %v788, %v914
        %vm916 = vcmask 130112
        %v917 = vsel %vm916, %v915, %v913
        %v918 = vadd.s32 %v912, 4294967280
        %v919 = vperm.slane %v791, %v918
        %vm920 = vcmask 195712
        %v921 = vsel %vm920, %v919, %v917
        %v922 = vadd.s32 %v912, 4294967272
        %v923 = vperm.slane %v794, %v922
        %vm924 = vcmask 261312
        %v925 = vsel %vm924, %v923, %v921
        %v926 = vperm.slane %v797, %v912
        %v927 = vperm.slane %v800, %v914
        %v928 = vsel %vm916, %v927, %v926
        %v929 = vperm.slane %v803, %v918
        %v930 = vsel %vm920, %v929, %v928
        %v931 = vperm.slane %v806, %v922
        %v932 = vsel %vm924, %v931, %v930
        %v933 = vperm.slane %v809, %v912
        %v934 = vperm.slane %v812, %v914
        %v935 = vsel %vm916, %v934, %v933
        %v936 = vperm.slane %v815, %v918
        %v937 = vsel %vm920, %v936, %v935
        %v938 = vperm.slane %v818, %v922
        %v939 = vsel %vm924, %v938, %v937
        %v940 = vperm.slane %v821, %v912
        %v941 = vperm.slane %v824, %v914
        %v942 = vsel %vm916, %v941, %v940
        %v943 = vperm.slane %v827, %v918
        %v944 = vsel %vm920, %v943, %v942
        %v945 = vperm.slane %v830, %v922
        %v946 = vsel %vm924, %v945, %v944
        %v947 = vperm.slane %v833, %v912
        %v948 = vperm.slane %v836, %v914
        %v949 = vsel %vm916, %v948, %v947
        %v950 = vperm.slane %v839, %v918
        %v951 = vsel %vm920, %v950, %v949
        %v952 = vperm.slane %v842, %v922
        %v953 = vsel %vm924, %v952, %v951
        %v954 = vperm.slane %v845, %v912
        %v955 = vperm.slane %v848, %v914
        %v956 = vsel %vm916, %v955, %v954
        %v957 = vperm.slane %v851, %v918
        %v958 = vsel %vm920, %v957, %v956
        %v959 = vperm.slane %v854, %v922
        %v960 = vsel %vm924, %v959, %v958
        %v961 = vperm.slane %v857, %v912
        %v962 = vperm.slane %v860, %v914
        %v963 = vsel %vm916, %v962, %v961
        %v964 = vperm.slane %v863, %v918
        %v965 = vsel %vm920, %v964, %v963
        %v966 = vperm.slane %v866, %v922
        %v967 = vsel %vm924, %v966, %v965
        %v968 = vperm.slane %v869, %v912
        %v969 = vperm.slane %v872, %v914
        %v970 = vsel %vm916, %v969, %v968
        %v971 = vperm.slane %v875, %v918
        %v972 = vsel %vm920, %v971, %v970
        %v973 = vperm.slane %v878, %v922
        %v974 = vsel %vm924, %v973, %v972
        %vm975 = vcmask 1041409
        %v976 = vsel %vm975, %v932, %v925
        %vm977 = vcmask 1042434
        %v978 = vsel %vm977, %v939, %v976
        %vm979 = vcmask 1043459
        %v980 = vsel %vm979, %v946, %v978
        %vm981 = vcmask 1044484
        %v982 = vsel %vm981, %v953, %v980
        %vm983 = vcmask 1045509
        %v984 = vsel %vm983, %v960, %v982
        %vm985 = vcmask 1046534
        %v986 = vsel %vm985, %v967, %v984
        %vm987 = vcmask 1047559
        %v988 = vsel %vm987, %v974, %v986
        %v990 = vsel %vm421, %v988, 0.0
        %991 = vadd.xlane.f32.xlu0 %v990
        %v992 = vpop.xlane.xlu0 %991
        %v993 = vrsqrt.pop %v992
        %v994 = vmul.f32 %v993, %v992
        %v995 = vmul.f32 %v994, %v993
        %v996 = vmul.f32 0.5, %v995
        %v997 = vsub.f32 1.5, %v996
        %v998 = vmul.f32 %v993, %v997
        %v999 = vmul.f32 %v992, %v998
        %vm1000 = vcmp.eq.f32.partialorder %v992, inf
        %v1001 = vsel %vm1000, %v992, %v999
        %vm1002 = vcmp.eq.f32.partialorder %v992, 0.0
        %v1003 = vand.u32 %v992, 2147483648
        %v1004 = vsel %vm1002, %v1003, %v1001
        %v1005 = vmax.f32 %v1004, 1e-12
        %v1006 = vrcp.pop %v1005
        %v1007 = vpack.c.bf16 %v719, %v719
        %v1008 = vpack.c.bf16 %v720, %v720
        %v1009 = vpack.c.bf16 %v721, %v721
        %v1010 = vpack.c.bf16 %v722, %v722
        %v1011 = vpack.c.bf16 %v723, %v723
        %v1012 = vpack.c.bf16 %v724, %v724
        %v1013 = vpack.c.bf16 %v725, %v725
        %v1014 = vpack.c.bf16 %v726, %v726
        %v1015 = vpack.c.bf16 %v727, %v727
        %v1016 = vpack.c.bf16 %v728, %v728
        %v1017 = vpack.c.bf16 %v729, %v729
        %v1018 = vpack.c.bf16 %v730, %v730
        %v1019 = vpack.c.bf16 %v731, %v731
        %v1020 = vpack.c.bf16 %v732, %v732
        %v1021 = vpack.c.bf16 %v733, %v733
        %v1022 = vpack.c.bf16 %v734, %v734
        %v1023 = vpack.c.bf16 %v735, %v735
        %v1024 = vpack.c.bf16 %v736, %v736
        %v1025 = vpack.c.bf16 %v737, %v737
        %v1026 = vpack.c.bf16 %v738, %v738
        %v1027 = vpack.c.bf16 %v739, %v739
        %v1028 = vpack.c.bf16 %v740, %v740
        %v1029 = vpack.c.bf16 %v741, %v741
        %v1030 = vpack.c.bf16 %v742, %v742
        %v1031 = vpack.c.bf16 %v743, %v743
        %v1032 = vpack.c.bf16 %v744, %v744
        %v1033 = vpack.c.bf16 %v745, %v745
        %v1034 = vpack.c.bf16 %v746, %v746
        %v1035 = vpack.c.bf16 %v747, %v747
        %v1036 = vpack.c.bf16 %v748, %v748
        %v1037 = vpack.c.bf16 %v749, %v749
        %v1038 = vpack.c.bf16 %v750, %v750
        %v1039 = vmul.f32 %v397, %v678
        %v1040 = vmul.f32 %v398, %v679
        %v1041 = vmul.f32 %v399, %v680
        %v1042 = vmul.f32 %v400, %v681
        %v1043 = vmul.f32 %v401, %v682
        %v1044 = vmul.f32 %v402, %v683
        %v1045 = vmul.f32 %v403, %v684
        %v1046 = vmul.f32 %v404, %v685
        %v1047 = vpack.c.bf16 %v1039, %v1039
        %v1048 = vpack.c.bf16 %v1040, %v1040
        %v1049 = vpack.c.bf16 %v1041, %v1041
        %v1050 = vpack.c.bf16 %v1042, %v1042
        %v1051 = vpack.c.bf16 %v1043, %v1043
        %v1052 = vpack.c.bf16 %v1044, %v1044
        %v1053 = vpack.c.bf16 %v1045, %v1045
        %v1054 = vpack.c.bf16 %v1046, %v1046
        %v1055 = vmul.f32 %v405, %v694
        %v1056 = vmul.f32 %v406, %v695
        %v1057 = vmul.f32 %v407, %v696
        %v1058 = vmul.f32 %v408, %v697
        %v1059 = vmul.f32 %v409, %v698
        %v1060 = vmul.f32 %v410, %v699
        %v1061 = vmul.f32 %v411, %v700
        %v1062 = vmul.f32 %v412, %v701
        %v1063 = vpack.c.bf16 %v1055, %v1055
        %v1064 = vpack.c.bf16 %v1056, %v1056
        %v1065 = vpack.c.bf16 %v1057, %v1057
        %v1066 = vpack.c.bf16 %v1058, %v1058
        %v1067 = vpack.c.bf16 %v1059, %v1059
        %v1068 = vpack.c.bf16 %v1060, %v1060
        %v1069 = vpack.c.bf16 %v1061, %v1061
        %v1070 = vpack.c.bf16 %v1062, %v1062
        %v1075 = vunpack.c.l.b16 %v1007
        %v1076 = vunpack.c.l.b16 %v1008
        %v1077 = vunpack.c.l.b16 %v1009
        %v1078 = vunpack.c.l.b16 %v1010
        %v1079 = vpack.c.b16 %v1076, %v1075
        %v1080 = vpack.c.b16 %v1078, %v1077
        %v1084 = vsel %vm421, %v1047, 0
        %1086 = vmatpush.bf16.msra.mxu0 0
        %1087 = vmatpush.bf16.msra.mxu0 0
        %1088 = vmatpush.bf16.msra.mxu0 0
        %1089 = vmatpush.bf16.msra.mxu0 0
        %1090 = vmatpush.bf16.msra.mxu0 0
        %1091 = vmatpush.bf16.msra.mxu0 0
        %1092 = vmatpush.bf16.msra.mxu0 %v1080
        %1093 = vmatpush.bf16.msra.mxu0 %v1079
        %1094 = vmatmul.bf16.gmra.mxu0 %v1084
        %v1095 = vpop.f32.mrf.mxu0
        %v1096 = vadd.f32 0.0, %v1095
        %v1097 = vpop.f32.mrf.mxu0
        %1098 = vdwg.mxu0
        %v1103 = vunpack.c.l.b16 %v1011
        %v1104 = vunpack.c.l.b16 %v1012
        %v1105 = vunpack.c.l.b16 %v1013
        %v1106 = vunpack.c.l.b16 %v1014
        %v1107 = vpack.c.b16 %v1104, %v1103
        %v1108 = vpack.c.b16 %v1106, %v1105
        %v1112 = vsel %vm421, %v1048, 0
        %1114 = vmatpush.bf16.msra.mxu0 0
        %1115 = vmatpush.bf16.msra.mxu0 0
        %1116 = vmatpush.bf16.msra.mxu0 0
        %1117 = vmatpush.bf16.msra.mxu0 0
        %1118 = vmatpush.bf16.msra.mxu0 0
        %1119 = vmatpush.bf16.msra.mxu0 0
        %1120 = vmatpush.bf16.msra.mxu0 %v1108
        %1121 = vmatpush.bf16.msra.mxu0 %v1107
        %1122 = vmatmul.bf16.gmra.mxu0 %v1112
        %v1123 = vpop.f32.mrf.mxu0
        %v1124 = vadd.f32 0.0, %v1123
        %v1125 = vpop.f32.mrf.mxu0
        %1126 = vdwg.mxu0
        %v1131 = vunpack.c.l.b16 %v1015
        %v1132 = vunpack.c.l.b16 %v1016
        %v1133 = vunpack.c.l.b16 %v1017
        %v1134 = vunpack.c.l.b16 %v1018
        %v1135 = vpack.c.b16 %v1132, %v1131
        %v1136 = vpack.c.b16 %v1134, %v1133
        %v1140 = vsel %vm421, %v1049, 0
        %1142 = vmatpush.bf16.msra.mxu0 0
        %1143 = vmatpush.bf16.msra.mxu0 0
        %1144 = vmatpush.bf16.msra.mxu0 0
        %1145 = vmatpush.bf16.msra.mxu0 0
        %1146 = vmatpush.bf16.msra.mxu0 0
        %1147 = vmatpush.bf16.msra.mxu0 0
        %1148 = vmatpush.bf16.msra.mxu0 %v1136
        %1149 = vmatpush.bf16.msra.mxu0 %v1135
        %1150 = vmatmul.bf16.gmra.mxu0 %v1140
        %v1151 = vpop.f32.mrf.mxu0
        %v1152 = vadd.f32 0.0, %v1151
        %v1153 = vpop.f32.mrf.mxu0
        %1154 = vdwg.mxu0
        %v1159 = vunpack.c.l.b16 %v1019
        %v1160 = vunpack.c.l.b16 %v1020
        %v1161 = vunpack.c.l.b16 %v1021
        %v1162 = vunpack.c.l.b16 %v1022
        %v1163 = vpack.c.b16 %v1160, %v1159
        %v1164 = vpack.c.b16 %v1162, %v1161
        %v1168 = vsel %vm421, %v1050, 0
        %1170 = vmatpush.bf16.msra.mxu0 0
        %1171 = vmatpush.bf16.msra.mxu0 0
        %1172 = vmatpush.bf16.msra.mxu0 0
        %1173 = vmatpush.bf16.msra.mxu0 0
        %1174 = vmatpush.bf16.msra.mxu0 0
        %1175 = vmatpush.bf16.msra.mxu0 0
        %1176 = vmatpush.bf16.msra.mxu0 %v1164
        %1177 = vmatpush.bf16.msra.mxu0 %v1163
        %1178 = vmatmul.bf16.gmra.mxu0 %v1168
        %v1179 = vpop.f32.mrf.mxu0
        %v1180 = vadd.f32 0.0, %v1179
        %v1181 = vpop.f32.mrf.mxu0
        %1182 = vdwg.mxu0
        %v1187 = vunpack.c.l.b16 %v1023
        %v1188 = vunpack.c.l.b16 %v1024
        %v1189 = vunpack.c.l.b16 %v1025
        %v1190 = vunpack.c.l.b16 %v1026
        %v1191 = vpack.c.b16 %v1188, %v1187
        %v1192 = vpack.c.b16 %v1190, %v1189
        %v1196 = vsel %vm421, %v1051, 0
        %1198 = vmatpush.bf16.msra.mxu0 0
        %1199 = vmatpush.bf16.msra.mxu0 0
        %1200 = vmatpush.bf16.msra.mxu0 0
        %1201 = vmatpush.bf16.msra.mxu0 0
        %1202 = vmatpush.bf16.msra.mxu0 0
        %1203 = vmatpush.bf16.msra.mxu0 0
        %1204 = vmatpush.bf16.msra.mxu0 %v1192
        %1205 = vmatpush.bf16.msra.mxu0 %v1191
        %1206 = vmatmul.bf16.gmra.mxu0 %v1196
        %v1207 = vpop.f32.mrf.mxu0
        %v1208 = vadd.f32 0.0, %v1207
        %v1209 = vpop.f32.mrf.mxu0
        %1210 = vdwg.mxu0
        %v1215 = vunpack.c.l.b16 %v1027
        %v1216 = vunpack.c.l.b16 %v1028
        %v1217 = vunpack.c.l.b16 %v1029
        %v1218 = vunpack.c.l.b16 %v1030
        %v1219 = vpack.c.b16 %v1216, %v1215
        %v1220 = vpack.c.b16 %v1218, %v1217
        %v1224 = vsel %vm421, %v1052, 0
        %1226 = vmatpush.bf16.msra.mxu0 0
        %1227 = vmatpush.bf16.msra.mxu0 0
        %1228 = vmatpush.bf16.msra.mxu0 0
        %1229 = vmatpush.bf16.msra.mxu0 0
        %1230 = vmatpush.bf16.msra.mxu0 0
        %1231 = vmatpush.bf16.msra.mxu0 0
        %1232 = vmatpush.bf16.msra.mxu0 %v1220
        %1233 = vmatpush.bf16.msra.mxu0 %v1219
        %1234 = vmatmul.bf16.gmra.mxu0 %v1224
        %v1235 = vpop.f32.mrf.mxu0
        %v1236 = vadd.f32 0.0, %v1235
        %v1237 = vpop.f32.mrf.mxu0
        %1238 = vdwg.mxu0
        %v1243 = vunpack.c.l.b16 %v1031
        %v1244 = vunpack.c.l.b16 %v1032
        %v1245 = vunpack.c.l.b16 %v1033
        %v1246 = vunpack.c.l.b16 %v1034
        %v1247 = vpack.c.b16 %v1244, %v1243
        %v1248 = vpack.c.b16 %v1246, %v1245
        %v1252 = vsel %vm421, %v1053, 0
        %1254 = vmatpush.bf16.msra.mxu0 0
        %1255 = vmatpush.bf16.msra.mxu0 0
        %1256 = vmatpush.bf16.msra.mxu0 0
        %1257 = vmatpush.bf16.msra.mxu0 0
        %1258 = vmatpush.bf16.msra.mxu0 0
        %1259 = vmatpush.bf16.msra.mxu0 0
        %1260 = vmatpush.bf16.msra.mxu0 %v1248
        %1261 = vmatpush.bf16.msra.mxu0 %v1247
        %1262 = vmatmul.bf16.gmra.mxu0 %v1252
        %v1263 = vpop.f32.mrf.mxu0
        %v1264 = vadd.f32 0.0, %v1263
        %v1265 = vpop.f32.mrf.mxu0
        %1266 = vdwg.mxu0
        %v1271 = vunpack.c.l.b16 %v1035
        %v1272 = vunpack.c.l.b16 %v1036
        %v1273 = vunpack.c.l.b16 %v1037
        %v1274 = vunpack.c.l.b16 %v1038
        %v1275 = vpack.c.b16 %v1272, %v1271
        %v1276 = vpack.c.b16 %v1274, %v1273
        %v1280 = vsel %vm421, %v1054, 0
        %1282 = vmatpush.bf16.msra.mxu0 0
        %1283 = vmatpush.bf16.msra.mxu0 0
        %1284 = vmatpush.bf16.msra.mxu0 0
        %1285 = vmatpush.bf16.msra.mxu0 0
        %1286 = vmatpush.bf16.msra.mxu0 0
        %1287 = vmatpush.bf16.msra.mxu0 0
        %1288 = vmatpush.bf16.msra.mxu0 %v1276
        %1289 = vmatpush.bf16.msra.mxu0 %v1275
        %1290 = vmatmul.bf16.gmra.mxu0 %v1280
        %v1291 = vpop.f32.mrf.mxu0
        %v1292 = vadd.f32 0.0, %v1291
        %v1293 = vpop.f32.mrf.mxu0
        %1294 = vdwg.mxu0
        %v1295 = vpack.c.bf16 %v1096, %v1096
        %v1296 = vpack.c.bf16 %v1124, %v1124
        %v1297 = vpack.c.bf16 %v1152, %v1152
        %v1298 = vpack.c.bf16 %v1180, %v1180
        %v1299 = vpack.c.bf16 %v1208, %v1208
        %v1300 = vpack.c.bf16 %v1236, %v1236
        %v1301 = vpack.c.bf16 %v1264, %v1264
        %v1302 = vpack.c.bf16 %v1292, %v1292
        %v1304 = vsel %vm421, %v1295, 0
        %v1307 = vsel %vm421, %v1063, 0
        %1309 = vmatpush.bf16.xpose.msra.mxu0 0
        %1310 = vmatpush.bf16.xpose.msra.mxu0 0
        %1311 = vmatpush.bf16.xpose.msra.mxu0 0
        %1312 = vmatpush.bf16.xpose.msra.mxu0 0
        %1313 = vmatpush.bf16.xpose.msra.mxu0 0
        %1314 = vmatpush.bf16.xpose.msra.mxu0 0
        %1315 = vmatpush.bf16.xpose.msra.mxu0 0
        %1316 = vmatpush.bf16.xpose.msra.mxu0 %v1307
        %1317 = vmatmul.bf16.gmra.mxu0 %v1304
        %v1318 = vpop.f32.mrf.mxu0
        %v1319 = vadd.f32 0.0, %v1318
        %v1320 = vpop.f32.mrf.mxu0
        %1321 = vdwg.mxu0
        %v1323 = vsel %vm421, %v1296, 0
        %v1326 = vsel %vm421, %v1064, 0
        %1328 = vmatpush.bf16.xpose.msra.mxu0 0
        %1329 = vmatpush.bf16.xpose.msra.mxu0 0
        %1330 = vmatpush.bf16.xpose.msra.mxu0 0
        %1331 = vmatpush.bf16.xpose.msra.mxu0 0
        %1332 = vmatpush.bf16.xpose.msra.mxu0 0
        %1333 = vmatpush.bf16.xpose.msra.mxu0 0
        %1334 = vmatpush.bf16.xpose.msra.mxu0 0
        %1335 = vmatpush.bf16.xpose.msra.mxu0 %v1326
        %1336 = vmatmul.bf16.gmra.mxu0 %v1323
        %v1337 = vpop.f32.mrf.mxu0
        %v1338 = vadd.f32 0.0, %v1337
        %v1339 = vpop.f32.mrf.mxu0
        %1340 = vdwg.mxu0
        %v1342 = vsel %vm421, %v1297, 0
        %v1345 = vsel %vm421, %v1065, 0
        %1347 = vmatpush.bf16.xpose.msra.mxu0 0
        %1348 = vmatpush.bf16.xpose.msra.mxu0 0
        %1349 = vmatpush.bf16.xpose.msra.mxu0 0
        %1350 = vmatpush.bf16.xpose.msra.mxu0 0
        %1351 = vmatpush.bf16.xpose.msra.mxu0 0
        %1352 = vmatpush.bf16.xpose.msra.mxu0 0
        %1353 = vmatpush.bf16.xpose.msra.mxu0 0
        %1354 = vmatpush.bf16.xpose.msra.mxu0 %v1345
        %1355 = vmatmul.bf16.gmra.mxu0 %v1342
        %v1356 = vpop.f32.mrf.mxu0
        %v1357 = vadd.f32 0.0, %v1356
        %v1358 = vpop.f32.mrf.mxu0
        %1359 = vdwg.mxu0
        %v1361 = vsel %vm421, %v1298, 0
        %v1364 = vsel %vm421, %v1066, 0
        %1366 = vmatpush.bf16.xpose.msra.mxu0 0
        %1367 = vmatpush.bf16.xpose.msra.mxu0 0
        %1368 = vmatpush.bf16.xpose.msra.mxu0 0
        %1369 = vmatpush.bf16.xpose.msra.mxu0 0
        %1370 = vmatpush.bf16.xpose.msra.mxu0 0
        %1371 = vmatpush.bf16.xpose.msra.mxu0 0
        %1372 = vmatpush.bf16.xpose.msra.mxu0 0
        %1373 = vmatpush.bf16.xpose.msra.mxu0 %v1364
        %1374 = vmatmul.bf16.gmra.mxu0 %v1361
        %v1375 = vpop.f32.mrf.mxu0
        %v1376 = vadd.f32 0.0, %v1375
        %v1377 = vpop.f32.mrf.mxu0
        %1378 = vdwg.mxu0
        %v1380 = vsel %vm421, %v1299, 0
        %v1383 = vsel %vm421, %v1067, 0
        %1385 = vmatpush.bf16.xpose.msra.mxu0 0
        %1386 = vmatpush.bf16.xpose.msra.mxu0 0
        %1387 = vmatpush.bf16.xpose.msra.mxu0 0
        %1388 = vmatpush.bf16.xpose.msra.mxu0 0
        %1389 = vmatpush.bf16.xpose.msra.mxu0 0
        %1390 = vmatpush.bf16.xpose.msra.mxu0 0
        %1391 = vmatpush.bf16.xpose.msra.mxu0 0
        %1392 = vmatpush.bf16.xpose.msra.mxu0 %v1383
        %1393 = vmatmul.bf16.gmra.mxu0 %v1380
        %v1394 = vpop.f32.mrf.mxu0
        %v1395 = vadd.f32 0.0, %v1394
        %v1396 = vpop.f32.mrf.mxu0
        %1397 = vdwg.mxu0
        %v1399 = vsel %vm421, %v1300, 0
        %v1402 = vsel %vm421, %v1068, 0
        %1404 = vmatpush.bf16.xpose.msra.mxu0 0
        %1405 = vmatpush.bf16.xpose.msra.mxu0 0
        %1406 = vmatpush.bf16.xpose.msra.mxu0 0
        %1407 = vmatpush.bf16.xpose.msra.mxu0 0
        %1408 = vmatpush.bf16.xpose.msra.mxu0 0
        %1409 = vmatpush.bf16.xpose.msra.mxu0 0
        %1410 = vmatpush.bf16.xpose.msra.mxu0 0
        %1411 = vmatpush.bf16.xpose.msra.mxu0 %v1402
        %1412 = vmatmul.bf16.gmra.mxu0 %v1399
        %v1413 = vpop.f32.mrf.mxu0
        %v1414 = vadd.f32 0.0, %v1413
        %v1415 = vpop.f32.mrf.mxu0
        %1416 = vdwg.mxu0
        %v1418 = vsel %vm421, %v1301, 0
        %v1421 = vsel %vm421, %v1069, 0
        %1423 = vmatpush.bf16.xpose.msra.mxu0 0
        %1424 = vmatpush.bf16.xpose.msra.mxu0 0
        %1425 = vmatpush.bf16.xpose.msra.mxu0 0
        %1426 = vmatpush.bf16.xpose.msra.mxu0 0
        %1427 = vmatpush.bf16.xpose.msra.mxu0 0
        %1428 = vmatpush.bf16.xpose.msra.mxu0 0
        %1429 = vmatpush.bf16.xpose.msra.mxu0 0
        %1430 = vmatpush.bf16.xpose.msra.mxu0 %v1421
        %1431 = vmatmul.bf16.gmra.mxu0 %v1418
        %v1432 = vpop.f32.mrf.mxu0
        %v1433 = vadd.f32 0.0, %v1432
        %v1434 = vpop.f32.mrf.mxu0
        %1435 = vdwg.mxu0
        %v1437 = vsel %vm421, %v1302, 0
        %v1440 = vsel %vm421, %v1070, 0
        %1442 = vmatpush.bf16.xpose.msra.mxu0 0
        %1443 = vmatpush.bf16.xpose.msra.mxu0 0
        %1444 = vmatpush.bf16.xpose.msra.mxu0 0
        %1445 = vmatpush.bf16.xpose.msra.mxu0 0
        %1446 = vmatpush.bf16.xpose.msra.mxu0 0
        %1447 = vmatpush.bf16.xpose.msra.mxu0 0
        %1448 = vmatpush.bf16.xpose.msra.mxu0 0
        %1449 = vmatpush.bf16.xpose.msra.mxu0 %v1440
        %1450 = vmatmul.bf16.gmra.mxu0 %v1437
        %v1451 = vpop.f32.mrf.mxu0
        %v1452 = vadd.f32 0.0, %v1451
        %v1453 = vpop.f32.mrf.mxu0
        %1454 = vdwg.mxu0
        %v1455 = vld [vmem:[%s240] sm:$0xff]
        %v1456 = vld [vmem:[%s240 + $0x8] sm:$0xff]
        %v1457 = vld [vmem:[%s240 + $0x10] sm:$0xff]
        %v1458 = vld [vmem:[%s240 + $0x18] sm:$0xff]
        %v1459 = vld [vmem:[%s240 + $0x20] sm:$0xff]
        %v1460 = vld [vmem:[%s240 + $0x28] sm:$0xff]
        %v1461 = vld [vmem:[%s240 + $0x30] sm:$0xff]
        %v1462 = vld [vmem:[%s240 + $0x38] sm:$0xff]
        %v1463 = vmul.f32 %v1455, %v1319
        %v1464 = vmul.f32 %v1456, %v1338
        %v1465 = vmul.f32 %v1457, %v1357
        %v1466 = vmul.f32 %v1458, %v1376
        %v1467 = vmul.f32 %v1459, %v1395
        %v1468 = vmul.f32 %v1460, %v1414
        %v1469 = vmul.f32 %v1461, %v1433
        %v1470 = vmul.f32 %v1462, %v1452
        %vm1471 = vcmask 64512
        %v1472 = vsel %vm1471, %v1463, 0.0
        %1473 = vadd.xlane.f32.xlu0 %v1472
        %v1474 = vpop.xlane.xlu0 %1473
        %v1475 = vsel %vm1471, %v1464, 0.0
        %1476 = vadd.xlane.f32.xlu0 %v1475
        %v1477 = vpop.xlane.xlu0 %1476
        %v1478 = vsel %vm1471, %v1465, 0.0
        %1479 = vadd.xlane.f32.xlu0 %v1478
        %v1480 = vpop.xlane.xlu0 %1479
        %v1481 = vsel %vm1471, %v1466, 0.0
        %1482 = vadd.xlane.f32.xlu0 %v1481
        %v1483 = vpop.xlane.xlu0 %1482
        %v1484 = vsel %vm1471, %v1467, 0.0
        %1485 = vadd.xlane.f32.xlu0 %v1484
        %v1486 = vpop.xlane.xlu0 %1485
        %v1487 = vsel %vm1471, %v1468, 0.0
        %1488 = vadd.xlane.f32.xlu0 %v1487
        %v1489 = vpop.xlane.xlu0 %1488
        %v1490 = vsel %vm1471, %v1469, 0.0
        %1491 = vadd.xlane.f32.xlu0 %v1490
        %v1492 = vpop.xlane.xlu0 %1491
        %v1493 = vsel %vm1471, %v1470, 0.0
        %1494 = vadd.xlane.f32.xlu0 %v1493
        %v1495 = vpop.xlane.xlu0 %1494
        %v1504 = vperm.slane %v1474, %v912
        %v1505 = vperm.slane %v1477, %v912
        %v1506 = vperm.slane %v1480, %v912
        %v1507 = vperm.slane %v1483, %v912
        %v1508 = vperm.slane %v1486, %v912
        %v1509 = vperm.slane %v1489, %v912
        %v1510 = vperm.slane %v1492, %v912
        %v1511 = vperm.slane %v1495, %v912
        %v1512 = vsel %vm975, %v1505, %v1504
        %v1513 = vsel %vm977, %v1506, %v1512
        %v1514 = vsel %vm979, %v1507, %v1513
        %v1515 = vsel %vm981, %v1508, %v1514
        %v1516 = vsel %vm983, %v1509, %v1515
        %v1517 = vsel %vm985, %v1510, %v1516
        %v1518 = vsel %vm987, %v1511, %v1517
        %v1520 = vsel %vm1471, %v1518, 0.0
        %1521 = vadd.xlane.f32.xlu0 %v1520
        %v1522 = vpop.xlane.xlu0 %1521
        %v1523 = vmul.f32 %v1522, %v1006
        %vm1524 = vcmask 7168
        %1525 = vst.msk [vmem:[%s245] sm:$0xff] %vm1524, %v1523
        %p1526 = scmp.lt.s32.totalorder %s27, 1
        %s1527 = scalar_select %p1526, %s27, 1
        %s1528 = smul.addr %s1527, 8
        %s1529 = scalar_lea.vmem %s5, %s1528
        // Predicated region
        $region69: #{tpu_custom_call.1} parent=31 // pred_check
          %p1530 = pneg %p123
        $region70: #{tpu_custom_call.1} parent=31 // pred_check_branch
          %1532 = sbr.rel (%p1530) target = $region72
        $region71: #{tpu_custom_call.1} parent=31 // pred_region
          _
        $region72: #{tpu_custom_call.1} parent=31 // pred_fallthru
          _
      $region32: #{tpu_custom_call.1} parent=5 // pred_fallthru
        _
      %p1533 = scmp.le.s32.totalorder 2, %s22
      // Predicated region
      $region73: #{tpu_custom_call.1} parent=5 // pred_check
        %p1534 = pneg %p1533
      $region74: #{tpu_custom_call.1} parent=5 // pred_check_branch
        %1536 = sbr.rel (%p1534) target = $region76
      $region75: #{tpu_custom_call.1} parent=5 // pred_region
        %s1537 = ssub.s32 %s22, 2
        // Predicated region
        $region77: #{tpu_custom_call.1} parent=75 // pred_check
          %p1538 = pneg %p129
        $region78: #{tpu_custom_call.1} parent=75 // pred_check_branch
          %1540 = sbr.rel (%p1538) target = $region80
        $region79: #{tpu_custom_call.1} parent=75 // pred_region
          %p1541 = scmp.lt.s32.totalorder %s28, 1
          %s1542 = scalar_select %p1541, %s28, 1
          %s1543 = smul.addr %s1542, 8
          %s1544 = scalar_lea.vmem %s5, %s1543
        $region80: #{tpu_custom_call.1} parent=75 // pred_fallthru
          _
      $region76: #{tpu_custom_call.1} parent=5 // pred_fallthru
        _
    $region6: #{tpu_custom_call.1} parent=1 // loop_footer
      %s26 = sadd.s32 1, %s22
    $region7: #{tpu_custom_call.1} parent=1 // loop_footer_branch
      %21 = sbr.rel target = $region3
    $region8: #{tpu_custom_call.1} parent=1 // loop_exit
      _
    %1545 = vsyncpa [#allocation7], 1
    %s1546 = scalar_lea.sflag [#allocation7], 1
    %1547 = vsyncpa %s1546, 1
  %1548 = vsyncmov [#allocation3]
  %s1549 = vpop.sfrf %1548
  %p1550 = scmp.eq.s32.totalorder %s1549, 0
  %p1551 = pneg %p1550
  %1553 = shalt.err (%p1551)
  %s1554 = scalar_lea.sflag [#allocation3], 1
  %1555 = vsyncmov %s1554
  %s1556 = vpop.sfrf %1555
  %p1557 = scmp.eq.s32.totalorder %s1556, 0
  %p1558 = pneg %p1557
  %1560 = shalt.err (%p1558)
  %s1561 = scalar_lea.sflag [#allocation3], 2
  %1562 = vsyncmov %s1561
  %s1563 = vpop.sfrf %1562
  %p1564 = scmp.eq.s32.totalorder %s1563, 0
  %p1565 = pneg %p1564
  %1567 = shalt.err (%p1565)
  %s1568 = scalar_lea.sflag [#allocation3], 3
  %1569 = vsyncmov %s1568
  %s1570 = vpop.sfrf %1569
  %p1571 = scmp.eq.s32.totalorder %s1570, 0
  %p1572 = pneg %p1571
  %1574 = shalt.err (%p1572)
  %s1575 = scalar_lea.sflag [#allocation3], 4
  %1576 = vsyncmov %s1575
  %s1577 = vpop.sfrf %1576
  %p1578 = scmp.eq.s32.totalorder %s1577, 0
  %p1579 = pneg %p1578
  %1581 = shalt.err (%p1579)
  %s1582 = scalar_lea.sflag [#allocation3], 5
  %1583 = vsyncmov %s1582
  %s1584 = vpop.sfrf %1583
  %p1585 = scmp.eq.s32.totalorder %s1584, 0
  %p1586 = pneg %p1585
  %1588 = shalt.err (%p1586)
  %s1589 = scalar_lea.sflag [#allocation3], 6
  %1590 = vsyncmov %s1589
  %s1591 = vpop.sfrf %1590
  %p1592 = scmp.eq.s32.totalorder %s1591, 0
  %p1593 = pneg %p1592
  %1595 = shalt.err (%p1593)
  %s1596 = scalar_lea.sflag [#allocation3], 7
  %1597 = vsyncmov %s1596
  %s1598 = vpop.sfrf %1597
  %p1599 = scmp.eq.s32.totalorder %s1598, 0
  %p1600 = pneg %p1599
  %1602 = shalt.err (%p1600)

</llo_original>
